<compile_context>
chip_gen: v6e
topology: v6e:2x2x1
jax: 0.10.0
libtpu: 0.0.40
codegen_flags: <defaults>
</compile_context>

<pallas_src>
import functools

import jax
import jax.numpy as jnp
from jax import lax
from jax.experimental import pallas as pl
from jax.experimental.pallas import tpu as pltpu

LN_EPS = 1e-5  # PyTorch nn.LayerNorm default


def _layernorm(x, g, b):
    mean = jnp.mean(x, axis=-1, keepdims=True)
    var = jnp.mean((x - mean) ** 2, axis=-1, keepdims=True)
    return (x - mean) * lax.rsqrt(var + LN_EPS) * g + b


# ----------------------------------------------------------------------------
# Kernel 1: patch embedding + CLS token + positional embedding
# (CLS row is folded into the same matmul via a zero-padded patch row, so the
#  kernel is a single bf16 matmul + fp32 add.)
# ----------------------------------------------------------------------------
def _embed_kernel(p_ref, w_ref, add_ref, o_ref):
    tok = jnp.dot(p_ref[0].astype(jnp.bfloat16), w_ref[...],
                  preferred_element_type=jnp.float32)          # [S, D]
    o_ref[0] = (tok + add_ref[...]).astype(o_ref.dtype)


def embed(p_aug, patch_w, add):
    B, S, CPP = p_aug.shape
    D = patch_w.shape[1]
    return pl.pallas_call(
        _embed_kernel,
        out_shape=jax.ShapeDtypeStruct((B, S, D), jnp.float32),
        grid=(B,),
        in_specs=[
            pl.BlockSpec((1, S, CPP), lambda b: (b, 0, 0)),
            pl.BlockSpec((CPP, D), lambda b: (0, 0)),
            pl.BlockSpec((S, D), lambda b: (0, 0)),
        ],
        out_specs=pl.BlockSpec((1, S, D), lambda b: (b, 0, 0)),
        compiler_params=pltpu.CompilerParams(
            dimension_semantics=("parallel",)),
    )(p_aug, patch_w, add)


# ----------------------------------------------------------------------------
# Kernel 2: fully fused transformer encoder (all layers in one pallas_call)
# ----------------------------------------------------------------------------
def _encoder_kernel(h_ref, ln1g, ln1b, qkvw, qkvb, projw, projb,
                    ln2g, ln2b, m1w, m1b, m2w, m2b, o_ref, acc_ref, *, heads):
    d = pl.program_id(1)

    @pl.when(d == 0)
    def _init():
        acc_ref[...] = h_ref[0].astype(jnp.float32)

    h = acc_ref[...]                                           # [S, D] carried in VMEM
    S, D = h.shape
    dh = D // heads
    scale = 1.0 / float(dh) ** 0.5

    # --- attention: LN1 -> fused QKV matmul -> per-head softmax(QK^T)V -> proj -> +res
    hn = _layernorm(h, ln1g[0], ln1b[0])
    qkv = jnp.dot(hn.astype(jnp.bfloat16), qkvw[0],
                  preferred_element_type=jnp.float32) + qkvb[0]          # [S, 3D]
    head_outs = []
    for hd in range(heads):                                    # static unroll; slices stay in VMEM
        q = (qkv[:, hd * dh:(hd + 1) * dh] * scale).astype(jnp.bfloat16)
        k = qkv[:, D + hd * dh:D + (hd + 1) * dh].astype(jnp.bfloat16)
        v = qkv[:, 2 * D + hd * dh:2 * D + (hd + 1) * dh].astype(jnp.bfloat16)
        # q @ k^T without an explicit in-kernel transpose (contract last dims)
        s = lax.dot_general(q, k, (((1,), (1,)), ((), ())),
                            preferred_element_type=jnp.float32)          # [S, S]
        m = jnp.max(s, axis=-1, keepdims=True)
        p = jnp.exp(s - m)
        inv = pl.reciprocal(jnp.sum(p, axis=-1, keepdims=True), approx=True)
        head_outs.append(
            jnp.dot(p.astype(jnp.bfloat16), v,
                    preferred_element_type=jnp.float32) * inv)
    attn = jnp.concatenate(head_outs, axis=-1)                           # [S, D]
    h = h + jnp.dot(attn.astype(jnp.bfloat16), projw[0],
                    preferred_element_type=jnp.float32) + projb[0]

    # --- MLP: LN2 -> Linear + GELU -> Linear -> +residual ---
    hn2 = _layernorm(h, ln2g[0], ln2b[0])
    m1 = jnp.dot(hn2.astype(jnp.bfloat16), m1w[0],
                 preferred_element_type=jnp.float32) + m1b[0]
    # TODO(synk): PyTorch nn.GELU default is exact erf; tanh approximation used here.
    m1 = jax.nn.gelu(m1, approximate=True)
    m2 = jnp.dot(m1.astype(jnp.bfloat16), m2w[0],
                 preferred_element_type=jnp.float32) + m2b[0]
    h = h + m2

    acc_ref[...] = h                                           # carry to next layer

    @pl.when(d == pl.num_programs(1) - 1)
    def _flush():
        o_ref[0] = h.astype(o_ref.dtype)                       # single HBM writeback per batch


def encoder(h0, blk, *, heads):
    B, S, D = h0.shape
    depth = blk["qkv_w"].shape[0]

    def wspec(arr):
        return pl.BlockSpec((1,) + arr.shape[1:], lambda b, d: (d, 0, 0))

    names = ["ln1_g", "ln1_b", "qkv_w", "qkv_b", "proj_w", "proj_b",
             "ln2_g", "ln2_b", "mlp1_w", "mlp1_b", "mlp2_w", "mlp2_b"]
    weights = [blk[n] for n in names]

    return pl.pallas_call(
        functools.partial(_encoder_kernel, heads=heads),
        out_shape=jax.ShapeDtypeStruct((B, S, D), jnp.float32),
        grid=(B, depth),
        in_specs=[pl.BlockSpec((1, S, D), lambda b, d: (b, 0, 0))]
                 + [wspec(w) for w in weights],
        out_specs=pl.BlockSpec((1, S, D), lambda b, d: (b, 0, 0)),
        scratch_shapes=[pltpu.VMEM((S, D), jnp.float32)],
        compiler_params=pltpu.CompilerParams(
            dimension_semantics=("parallel", "arbitrary")),
    )(h0, *weights)


# ----------------------------------------------------------------------------
# Kernel 3: final LayerNorm on the CLS feature + selected classifier head
# ----------------------------------------------------------------------------
def _head_kernel(cls_ref, g_ref, b_ref, w_ref, hb_ref, o_ref):
    xn = _layernorm(cls_ref[...].astype(jnp.float32), g_ref[...], b_ref[...])
    out = jnp.dot(xn.astype(jnp.bfloat16), w_ref[...],
                  preferred_element_type=jnp.float32) + hb_ref[...]
    o_ref[...] = out.astype(o_ref.dtype)


def cls_head(cls_tok, ln_g, ln_b, w, b):
    B, D = cls_tok.shape
    O = w.shape[1]
    return pl.pallas_call(
        _head_kernel,
        out_shape=jax.ShapeDtypeStruct((B, O), jnp.float32),
        grid=(1,),
        in_specs=[
            pl.BlockSpec((B, D), lambda i: (0, 0)),
            pl.BlockSpec((1, D), lambda i: (0, 0)),
            pl.BlockSpec((1, D), lambda i: (0, 0)),
            pl.BlockSpec((D, O), lambda i: (0, 0)),
            pl.BlockSpec((1, O), lambda i: (0, 0)),
        ],
        out_specs=pl.BlockSpec((B, O), lambda i: (0, 0)),
    )(cls_tok, ln_g, ln_b, w, b)


# ----------------------------------------------------------------------------
# Parameters (weights stored bf16 for MXU; norms/biases fp32) and forward pass
# ----------------------------------------------------------------------------
def init_params(key, *, C, P, D, depth, heads, mlp_dim, num_patches):
    del heads
    ks = iter(jax.random.split(key, 64))
    s = 0.02
    f32, bf16 = jnp.float32, jnp.bfloat16
    S = num_patches + 1

    def w(k, shape):
        return (s * jax.random.normal(k, shape, f32)).astype(bf16)

    params = {
        "patch_w": w(next(ks), (C * P * P, D)),
        "patch_b": jnp.zeros((1, D), f32),
        "cls": s * jax.random.normal(next(ks), (1, D), f32),
        "pos": s * jax.random.normal(next(ks), (S, D), f32),
        "ln_f_g": jnp.ones((1, D), f32),
        "ln_f_b": jnp.zeros((1, D), f32),
    }
    # per-layer weights stacked along a leading depth axis so the whole encoder
    # runs as a single pallas_call with grid=(B, depth)
    params["blocks"] = {
        "ln1_g": jnp.ones((depth, 1, D), f32),
        "ln1_b": jnp.zeros((depth, 1, D), f32),
        "qkv_w": jnp.stack([w(next(ks), (D, 3 * D)) for _ in range(depth)]),
        "qkv_b": jnp.zeros((depth, 1, 3 * D), f32),
        "proj_w": jnp.stack([w(next(ks), (D, D)) for _ in range(depth)]),
        "proj_b": jnp.zeros((depth, 1, D), f32),
        "ln2_g": jnp.ones((depth, 1, D), f32),
        "ln2_b": jnp.zeros((depth, 1, D), f32),
        "mlp1_w": jnp.stack([w(next(ks), (D, mlp_dim)) for _ in range(depth)]),
        "mlp1_b": jnp.zeros((depth, 1, mlp_dim), f32),
        "mlp2_w": jnp.stack([w(next(ks), (mlp_dim, D)) for _ in range(depth)]),
        "mlp2_b": jnp.zeros((depth, 1, D), f32),
    }
    # classifier heads: Linear(dim, 10), Linear(dim, 6), Linear(dim, 2)
    params["heads"] = [{"w": w(next(ks), (D, o)), "b": jnp.zeros((1, o), f32)}
                       for o in (10, 6, 2)]
    return params


def vit_model_forward(params, x, ds, *, patch=4, heads=4):
    """ViTModel.forward(x, ds): feature = vit(x); out = classifiers[int(ds)](feature)."""
    ds = int(ds)  # static head selection, matches `int(ds)` in the PyTorch forward
    B, C, H, W = x.shape
    P = patch
    Hp, Wp = H // P, W // P
    N = Hp * Wp

    # Conv2d(k=P, stride=P)-style patch flatten (channel-major per patch) with a zero
    # row prepended per image so the CLS position falls out of the same matmul.
    # Kept as tiny XLA glue on a KB-scale tensor; the projection runs in-kernel.
    xp = x.reshape(B, C, Hp, P, Wp, P).transpose(0, 2, 4, 1, 3, 5).reshape(B, N, C * P * P)
    p_aug = jnp.pad(xp.astype(jnp.float32), ((0, 0), (1, 0), (0, 0)))     # [B, S, CPP]

    # additive term per token: row 0 -> cls + pos[0]; rows 1.. -> patch_b + pos[1:]
    add = jnp.concatenate(
        [params["cls"] + params["pos"][0:1],
         params["patch_b"] + params["pos"][1:]], axis=0)                   # [S, D]

    h = embed(p_aug, params["patch_w"], add)                               # [B, S, D]
    h = encoder(h, params["blocks"], heads=heads)                          # [B, S, D]

    cls_tok = h[:, 0, :]                                                   # [B, D] CLS feature
    head = params["heads"][ds]
    return cls_head(cls_tok, params["ln_f_g"], params["ln_f_b"], head["w"], head["b"])


if __name__ == "__main__":
    key = jax.random.PRNGKey(0)
    kx, kp = jax.random.split(key)

    B, C, H, W = 2, 4, 16, 16
    P, D, depth, heads, mlp_dim = 4, 32, 2, 4, 64
    num_patches = (H // P) * (W // P)

    x = jax.random.normal(kx, (B, C, H, W), jnp.float32)
    params = init_params(kp, C=C, P=P, D=D, depth=depth, heads=heads,
                         mlp_dim=mlp_dim, num_patches=num_patches)

    ds = 0  # select classifiers[0]: Linear(dim, 10)
    fwd = jax.jit(functools.partial(vit_model_forward, patch=P, heads=heads),
                  static_argnums=(2,))
    out = jax.block_until_ready(fwd(params, x, ds))
    assert out.shape == (B, 10) and out.dtype == jnp.float32
    assert bool(jnp.isfinite(out).all())
    print("KERNEL_OK")
</pallas_src>

<mosaic_0001>
module attributes {stable_mosaic.version = 11 : i64} {
  func.func @_embed_kernel(%arg0: i32, %arg1: memref<1x17x64xf32, #tpu.memory_space<vmem>>, %arg2: memref<64x32xbf16, #tpu.memory_space<vmem>>, %arg3: memref<17x32xf32, #tpu.memory_space<vmem>>, %arg4: memref<1x17x32xf32, #tpu.memory_space<vmem>>) attributes {dimension_semantics = [#tpu.dimension_semantics<parallel>], iteration_bounds = array<i64: 2>, scalar_prefetch = 0 : i64, scratch_operands = 0 : i64, tpu.core_type = #tpu.core_type<tc>, window_params = [{transform_indices = @transform_0, window_bounds = array<i64: 1, 17, 64>}, {pipeline_mode = #tpu.pipeline_mode<synchronous>, transform_indices = @transform_1, window_bounds = array<i64: 64, 32>}, {pipeline_mode = #tpu.pipeline_mode<synchronous>, transform_indices = @transform_2, window_bounds = array<i64: 17, 32>}, {transform_indices = @transform_3, window_bounds = array<i64: 1, 17, 32>}]} {
    %c0 = arith.constant 0 : index
    %c0_0 = arith.constant 0 : index
    %c0_1 = arith.constant 0 : index
    %0 = vector.load %arg1[%c0, %c0_0, %c0_1] : memref<1x17x64xf32, #tpu.memory_space<vmem>>, vector<1x17x64xf32>
    %1 = vector.shape_cast %0 : vector<1x17x64xf32> to vector<17x64xf32>
    %2 = arith.truncf %1 : vector<17x64xf32> to vector<17x64xbf16>
    %c0_2 = arith.constant 0 : index
    %c0_3 = arith.constant 0 : index
    %3 = vector.load %arg2[%c0_2, %c0_3] : memref<64x32xbf16, #tpu.memory_space<vmem>>, vector<64x32xbf16>
    %cst = arith.constant dense<0.000000e+00> : vector<17x32xf32>
    %4 = tpu.matmul %2, %3, %cst {dimension_numbers = #tpu.dot_dimension_numbers<[1], [0], [0], [1], [0, 0, 1, 1], [], []>} : vector<17x64xbf16>, vector<64x32xbf16>, vector<17x32xf32> -> vector<17x32xf32>
    %c0_4 = arith.constant 0 : index
    %c0_5 = arith.constant 0 : index
    %5 = vector.load %arg3[%c0_4, %c0_5] : memref<17x32xf32, #tpu.memory_space<vmem>>, vector<17x32xf32>
    %6 = arith.addf %4, %5 : vector<17x32xf32>
    %c0_6 = arith.constant 0 : index
    %c0_7 = arith.constant 0 : index
    %c0_8 = arith.constant 0 : index
    %7 = vector.load %arg4[%c0_6, %c0_7, %c0_8] : memref<1x17x32xf32, #tpu.memory_space<vmem>>, vector<1x17x32xf32>
    %8 = vector.shape_cast %7 : vector<1x17x32xf32> to vector<17x32xf32>
    %9 = vector.shape_cast %6 : vector<17x32xf32> to vector<1x17x32xf32>
    tpu.vector_store %arg4[%c0_6, %c0_7, %c0_8], %9 {strides = array<i32>} : memref<1x17x32xf32, #tpu.memory_space<vmem>>, vector<1x17x32xf32>,
    return
  }
  func.func @transform_0(%arg0: i32) -> (i32, i32, i32) {
    %c0_i32 = arith.constant 0 : i32
    %c0_i32_0 = arith.constant 0 : i32
    %c0_i32_1 = arith.constant 0 : i32
    return %arg0, %c0_i32, %c0_i32_0 : i32, i32, i32
  }
  func.func @transform_1(%arg0: i32) -> (i32, i32) {
    %c0_i32 = arith.constant 0 : i32
    %c0_i32_0 = arith.constant 0 : i32
    %c0_i32_1 = arith.constant 0 : i32
    return %c0_i32, %c0_i32_0 : i32, i32
  }
  func.func @transform_2(%arg0: i32) -> (i32, i32) {
    %c0_i32 = arith.constant 0 : i32
    %c0_i32_0 = arith.constant 0 : i32
    %c0_i32_1 = arith.constant 0 : i32
    return %c0_i32, %c0_i32_0 : i32, i32
  }
  func.func @transform_3(%arg0: i32) -> (i32, i32, i32) {
    %c0_i32 = arith.constant 0 : i32
    %c0_i32_0 = arith.constant 0 : i32
    %c0_i32_1 = arith.constant 0 : i32
    return %arg0, %c0_i32, %c0_i32_0 : i32, i32, i32
  }
}

module attributes {stable_mosaic.version = 11 : i64} {
  func.func @_encoder_kernel(%arg0: i32, %arg1: i32, %arg2: memref<1x17x32xf32, #tpu.memory_space<vmem>>, %arg3: memref<1x1x32xf32, #tpu.memory_space<vmem>>, %arg4: memref<1x1x32xf32, #tpu.memory_space<vmem>>, %arg5: memref<1x32x96xbf16, #tpu.memory_space<vmem>>, %arg6: memref<1x1x96xf32, #tpu.memory_space<vmem>>, %arg7: memref<1x32x32xbf16, #tpu.memory_space<vmem>>, %arg8: memref<1x1x32xf32, #tpu.memory_space<vmem>>, %arg9: memref<1x1x32xf32, #tpu.memory_space<vmem>>, %arg10: memref<1x1x32xf32, #tpu.memory_space<vmem>>, %arg11: memref<1x32x64xbf16, #tpu.memory_space<vmem>>, %arg12: memref<1x1x64xf32, #tpu.memory_space<vmem>>, %arg13: memref<1x64x32xbf16, #tpu.memory_space<vmem>>, %arg14: memref<1x1x32xf32, #tpu.memory_space<vmem>>, %arg15: memref<1x17x32xf32, #tpu.memory_space<vmem>>, %arg16: memref<17x32xf32, #tpu.memory_space<vmem>>) attributes {dimension_semantics = [#tpu.dimension_semantics<parallel>, #tpu.dimension_semantics<arbitrary>], iteration_bounds = array<i64: 2, 2>, scalar_prefetch = 0 : i64, scratch_operands = 1 : i64, tpu.core_type = #tpu.core_type<tc>, window_params = [{transform_indices = @transform_0, window_bounds = array<i64: 1, 17, 32>}, {transform_indices = @transform_1, window_bounds = array<i64: 1, 1, 32>}, {transform_indices = @transform_2, window_bounds = array<i64: 1, 1, 32>}, {transform_indices = @transform_3, window_bounds = array<i64: 1, 32, 96>}, {transform_indices = @transform_4, window_bounds = array<i64: 1, 1, 96>}, {transform_indices = @transform_5, window_bounds = array<i64: 1, 32, 32>}, {transform_indices = @transform_6, window_bounds = array<i64: 1, 1, 32>}, {transform_indices = @transform_7, window_bounds = array<i64: 1, 1, 32>}, {transform_indices = @transform_8, window_bounds = array<i64: 1, 1, 32>}, {transform_indices = @transform_9, window_bounds = array<i64: 1, 32, 64>}, {transform_indices = @transform_10, window_bounds = array<i64: 1, 1, 64>}, {transform_indices = @transform_11, window_bounds = array<i64: 1, 64, 32>}, {transform_indices = @transform_12, window_bounds = array<i64: 1, 1, 32>}, {transform_indices = @transform_13, window_bounds = array<i64: 1, 17, 32>}]} {
    %c0_i32 = arith.constant 0 : i32
    %0 = arith.cmpi eq, %arg1, %c0_i32 : i32
    %1 = arith.extui %0 : i1 to i32
    %c0_i32_0 = arith.constant 0 : i32
    %2 = arith.cmpi ne, %1, %c0_i32_0 : i32
    scf.if %2 {
      %c0_78 = arith.constant 0 : index
      %c0_79 = arith.constant 0 : index
      %c0_80 = arith.constant 0 : index
      %192 = vector.load %arg2[%c0_78, %c0_79, %c0_80] : memref<1x17x32xf32, #tpu.memory_space<vmem>>, vector<1x17x32xf32>
      %193 = vector.shape_cast %192 : vector<1x17x32xf32> to vector<17x32xf32>
      %c0_81 = arith.constant 0 : index
      %c0_82 = arith.constant 0 : index
      %194 = vector.load %arg16[%c0_81, %c0_82] : memref<17x32xf32, #tpu.memory_space<vmem>>, vector<17x32xf32>
      tpu.vector_store %arg16[%c0_81, %c0_82], %193 {strides = array<i32>} : memref<17x32xf32, #tpu.memory_space<vmem>>, vector<17x32xf32>,
    } else {
    }
    %c0 = arith.constant 0 : index
    %c0_1 = arith.constant 0 : index
    %3 = vector.load %arg16[%c0, %c0_1] : memref<17x32xf32, #tpu.memory_space<vmem>>, vector<17x32xf32>
    %c0_2 = arith.constant 0 : index
    %c0_3 = arith.constant 0 : index
    %c0_4 = arith.constant 0 : index
    %4 = vector.load %arg3[%c0_2, %c0_3, %c0_4] : memref<1x1x32xf32, #tpu.memory_space<vmem>>, vector<1x1x32xf32>
    %5 = vector.shape_cast %4 : vector<1x1x32xf32> to vector<1x32xf32>
    %c0_5 = arith.constant 0 : index
    %c0_6 = arith.constant 0 : index
    %c0_7 = arith.constant 0 : index
    %6 = vector.load %arg4[%c0_5, %c0_6, %c0_7] : memref<1x1x32xf32, #tpu.memory_space<vmem>>, vector<1x1x32xf32>
    %7 = vector.shape_cast %6 : vector<1x1x32xf32> to vector<1x32xf32>
    %cst = arith.constant dense<0.000000e+00> : vector<17xf32>
    %8 = vector.multi_reduction <add>, %3, %cst [1] : vector<17x32xf32> to vector<17xf32>
    %9 = vector.shape_cast %8 : vector<17xf32> to vector<17x1xf32>
    %cst_8 = arith.constant 3.200000e+01 : f32
    %10 = vector.broadcast %cst_8 : f32 to vector<17x1xf32>
    %11 = arith.divf %9, %10 : vector<17x1xf32>
    %12 = vector.broadcast %11 : vector<17x1xf32> to vector<17x32xf32>
    %13 = arith.subf %3, %12 : vector<17x32xf32>
    %14 = arith.mulf %13, %13 : vector<17x32xf32>
    %cst_9 = arith.constant dense<0.000000e+00> : vector<17xf32>
    %15 = vector.multi_reduction <add>, %14, %cst_9 [1] : vector<17x32xf32> to vector<17xf32>
    %16 = vector.shape_cast %15 : vector<17xf32> to vector<17x1xf32>
    %cst_10 = arith.constant 3.200000e+01 : f32
    %17 = vector.broadcast %cst_10 : f32 to vector<17x1xf32>
    %18 = arith.divf %16, %17 : vector<17x1xf32>
    %19 = vector.broadcast %11 : vector<17x1xf32> to vector<17x32xf32>
    %20 = arith.subf %3, %19 : vector<17x32xf32>
    %cst_11 = arith.constant 9.99999974E-6 : f32
    %21 = vector.broadcast %cst_11 : f32 to vector<17x1xf32>
    %22 = arith.addf %18, %21 : vector<17x1xf32>
    %23 = math.rsqrt %22 : vector<17x1xf32>
    %24 = vector.broadcast %23 : vector<17x1xf32> to vector<17x32xf32>
    %25 = arith.mulf %20, %24 : vector<17x32xf32>
    %26 = vector.broadcast %5 : vector<1x32xf32> to vector<17x32xf32>
    %27 = arith.mulf %25, %26 : vector<17x32xf32>
    %28 = vector.broadcast %7 : vector<1x32xf32> to vector<17x32xf32>
    %29 = arith.addf %27, %28 : vector<17x32xf32>
    %30 = arith.truncf %29 : vector<17x32xf32> to vector<17x32xbf16>
    %c0_12 = arith.constant 0 : index
    %c0_13 = arith.constant 0 : index
    %c0_14 = arith.constant 0 : index
    %31 = vector.load %arg5[%c0_12, %c0_13, %c0_14] : memref<1x32x96xbf16, #tpu.memory_space<vmem>>, vector<1x32x96xbf16>
    %32 = vector.shape_cast %31 : vector<1x32x96xbf16> to vector<32x96xbf16>
    %cst_15 = arith.constant dense<0.000000e+00> : vector<17x96xf32>
    %33 = tpu.matmul %30, %32, %cst_15 {dimension_numbers = #tpu.dot_dimension_numbers<[1], [0], [0], [1], [0, 0, 1, 1], [], []>} : vector<17x32xbf16>, vector<32x96xbf16>, vector<17x96xf32> -> vector<17x96xf32>
    %c0_16 = arith.constant 0 : index
    %c0_17 = arith.constant 0 : index
    %c0_18 = arith.constant 0 : index
    %34 = vector.load %arg6[%c0_16, %c0_17, %c0_18] : memref<1x1x96xf32, #tpu.memory_space<vmem>>, vector<1x1x96xf32>
    %35 = vector.shape_cast %34 : vector<1x1x96xf32> to vector<1x96xf32>
    %36 = vector.broadcast %35 : vector<1x96xf32> to vector<17x96xf32>
    %37 = arith.addf %33, %36 : vector<17x96xf32>
    %38 = vector.extract_strided_slice %37 {offsets = [0, 0], sizes = [17, 8], strides = [1, 1]} : vector<17x96xf32> to vector<17x8xf32>
    %cst_19 = arith.constant 0.353553385 : f32
    %39 = vector.broadcast %cst_19 : f32 to vector<17x8xf32>
    %40 = arith.mulf %38, %39 : vector<17x8xf32>
    %41 = arith.truncf %40 : vector<17x8xf32> to vector<17x8xbf16>
    %42 = vector.extract_strided_slice %37 {offsets = [0, 32], sizes = [17, 8], strides = [1, 1]} : vector<17x96xf32> to vector<17x8xf32>
    %43 = arith.truncf %42 : vector<17x8xf32> to vector<17x8xbf16>
    %44 = vector.extract_strided_slice %37 {offsets = [0, 64], sizes = [17, 8], strides = [1, 1]} : vector<17x96xf32> to vector<17x8xf32>
    %45 = arith.truncf %44 : vector<17x8xf32> to vector<17x8xbf16>
    %cst_20 = arith.constant dense<0.000000e+00> : vector<17x17xf32>
    %46 = tpu.matmul %41, %43, %cst_20 {dimension_numbers = #tpu.dot_dimension_numbers<[1], [1], [0], [0], [0, 0, 1, 0], [], []>} : vector<17x8xbf16>, vector<17x8xbf16>, vector<17x17xf32> -> vector<17x17xf32>
    %cst_21 = arith.constant dense<0xFF800000> : vector<17xf32>
    %47 = vector.multi_reduction <maximumf>, %46, %cst_21 [1] : vector<17x17xf32> to vector<17xf32>
    %48 = vector.shape_cast %47 : vector<17xf32> to vector<17x1xf32>
    %49 = vector.broadcast %48 : vector<17x1xf32> to vector<17x17xf32>
    %50 = arith.subf %46, %49 : vector<17x17xf32>
    %51 = math.exp %50 : vector<17x17xf32>
    %cst_22 = arith.constant dense<0.000000e+00> : vector<17xf32>
    %52 = vector.multi_reduction <add>, %51, %cst_22 [1] : vector<17x17xf32> to vector<17xf32>
    %53 = vector.shape_cast %52 : vector<17xf32> to vector<17x1xf32>
    %54 = tpu.reciprocal %53 {approx = true} : vector<17x1xf32> -> vector<17x1xf32>
    %55 = arith.truncf %51 : vector<17x17xf32> to vector<17x17xbf16>
    %cst_23 = arith.constant dense<0.000000e+00> : vector<17x8xf32>
    %56 = tpu.matmul %55, %45, %cst_23 {dimension_numbers = #tpu.dot_dimension_numbers<[1], [0], [0], [1], [0, 0, 1, 1], [], []>} : vector<17x17xbf16>, vector<17x8xbf16>, vector<17x8xf32> -> vector<17x8xf32>
    %57 = vector.broadcast %54 : vector<17x1xf32> to vector<17x8xf32>
    %58 = arith.mulf %56, %57 : vector<17x8xf32>
    %59 = vector.extract_strided_slice %37 {offsets = [0, 8], sizes = [17, 8], strides = [1, 1]} : vector<17x96xf32> to vector<17x8xf32>
    %cst_24 = arith.constant 0.353553385 : f32
    %60 = vector.broadcast %cst_24 : f32 to vector<17x8xf32>
    %61 = arith.mulf %59, %60 : vector<17x8xf32>
    %62 = arith.truncf %61 : vector<17x8xf32> to vector<17x8xbf16>
    %63 = vector.extract_strided_slice %37 {offsets = [0, 40], sizes = [17, 8], strides = [1, 1]} : vector<17x96xf32> to vector<17x8xf32>
    %64 = arith.truncf %63 : vector<17x8xf32> to vector<17x8xbf16>
    %65 = vector.extract_strided_slice %37 {offsets = [0, 72], sizes = [17, 8], strides = [1, 1]} : vector<17x96xf32> to vector<17x8xf32>
    %66 = arith.truncf %65 : vector<17x8xf32> to vector<17x8xbf16>
    %cst_25 = arith.constant dense<0.000000e+00> : vector<17x17xf32>
    %67 = tpu.matmul %62, %64, %cst_25 {dimension_numbers = #tpu.dot_dimension_numbers<[1], [1], [0], [0], [0, 0, 1, 0], [], []>} : vector<17x8xbf16>, vector<17x8xbf16>, vector<17x17xf32> -> vector<17x17xf32>
    %cst_26 = arith.constant dense<0xFF800000> : vector<17xf32>
    %68 = vector.multi_reduction <maximumf>, %67, %cst_26 [1] : vector<17x17xf32> to vector<17xf32>
    %69 = vector.shape_cast %68 : vector<17xf32> to vector<17x1xf32>
    %70 = vector.broadcast %69 : vector<17x1xf32> to vector<17x17xf32>
    %71 = arith.subf %67, %70 : vector<17x17xf32>
    %72 = math.exp %71 : vector<17x17xf32>
    %cst_27 = arith.constant dense<0.000000e+00> : vector<17xf32>
    %73 = vector.multi_reduction <add>, %72, %cst_27 [1] : vector<17x17xf32> to vector<17xf32>
    %74 = vector.shape_cast %73 : vector<17xf32> to vector<17x1xf32>
    %75 = tpu.reciprocal %74 {approx = true} : vector<17x1xf32> -> vector<17x1xf32>
    %76 = arith.truncf %72 : vector<17x17xf32> to vector<17x17xbf16>
    %cst_28 = arith.constant dense<0.000000e+00> : vector<17x8xf32>
    %77 = tpu.matmul %76, %66, %cst_28 {dimension_numbers = #tpu.dot_dimension_numbers<[1], [0], [0], [1], [0, 0, 1, 1], [], []>} : vector<17x17xbf16>, vector<17x8xbf16>, vector<17x8xf32> -> vector<17x8xf32>
    %78 = vector.broadcast %75 : vector<17x1xf32> to vector<17x8xf32>
    %79 = arith.mulf %77, %78 : vector<17x8xf32>
    %80 = vector.extract_strided_slice %37 {offsets = [0, 16], sizes = [17, 8], strides = [1, 1]} : vector<17x96xf32> to vector<17x8xf32>
    %cst_29 = arith.constant 0.353553385 : f32
    %81 = vector.broadcast %cst_29 : f32 to vector<17x8xf32>
    %82 = arith.mulf %80, %81 : vector<17x8xf32>
    %83 = arith.truncf %82 : vector<17x8xf32> to vector<17x8xbf16>
    %84 = vector.extract_strided_slice %37 {offsets = [0, 48], sizes = [17, 8], strides = [1, 1]} : vector<17x96xf32> to vector<17x8xf32>
    %85 = arith.truncf %84 : vector<17x8xf32> to vector<17x8xbf16>
    %86 = vector.extract_strided_slice %37 {offsets = [0, 80], sizes = [17, 8], strides = [1, 1]} : vector<17x96xf32> to vector<17x8xf32>
    %87 = arith.truncf %86 : vector<17x8xf32> to vector<17x8xbf16>
    %cst_30 = arith.constant dense<0.000000e+00> : vector<17x17xf32>
    %88 = tpu.matmul %83, %85, %cst_30 {dimension_numbers = #tpu.dot_dimension_numbers<[1], [1], [0], [0], [0, 0, 1, 0], [], []>} : vector<17x8xbf16>, vector<17x8xbf16>, vector<17x17xf32> -> vector<17x17xf32>
    %cst_31 = arith.constant dense<0xFF800000> : vector<17xf32>
    %89 = vector.multi_reduction <maximumf>, %88, %cst_31 [1] : vector<17x17xf32> to vector<17xf32>
    %90 = vector.shape_cast %89 : vector<17xf32> to vector<17x1xf32>
    %91 = vector.broadcast %90 : vector<17x1xf32> to vector<17x17xf32>
    %92 = arith.subf %88, %91 : vector<17x17xf32>
    %93 = math.exp %92 : vector<17x17xf32>
    %cst_32 = arith.constant dense<0.000000e+00> : vector<17xf32>
    %94 = vector.multi_reduction <add>, %93, %cst_32 [1] : vector<17x17xf32> to vector<17xf32>
    %95 = vector.shape_cast %94 : vector<17xf32> to vector<17x1xf32>
    %96 = tpu.reciprocal %95 {approx = true} : vector<17x1xf32> -> vector<17x1xf32>
    %97 = arith.truncf %93 : vector<17x17xf32> to vector<17x17xbf16>
    %cst_33 = arith.constant dense<0.000000e+00> : vector<17x8xf32>
    %98 = tpu.matmul %97, %87, %cst_33 {dimension_numbers = #tpu.dot_dimension_numbers<[1], [0], [0], [1], [0, 0, 1, 1], [], []>} : vector<17x17xbf16>, vector<17x8xbf16>, vector<17x8xf32> -> vector<17x8xf32>
    %99 = vector.broadcast %96 : vector<17x1xf32> to vector<17x8xf32>
    %100 = arith.mulf %98, %99 : vector<17x8xf32>
    %101 = vector.extract_strided_slice %37 {offsets = [0, 24], sizes = [17, 8], strides = [1, 1]} : vector<17x96xf32> to vector<17x8xf32>
    %cst_34 = arith.constant 0.353553385 : f32
    %102 = vector.broadcast %cst_34 : f32 to vector<17x8xf32>
    %103 = arith.mulf %101, %102 : vector<17x8xf32>
    %104 = arith.truncf %103 : vector<17x8xf32> to vector<17x8xbf16>
    %105 = vector.extract_strided_slice %37 {offsets = [0, 56], sizes = [17, 8], strides = [1, 1]} : vector<17x96xf32> to vector<17x8xf32>
    %106 = arith.truncf %105 : vector<17x8xf32> to vector<17x8xbf16>
    %107 = vector.extract_strided_slice %37 {offsets = [0, 88], sizes = [17, 8], strides = [1, 1]} : vector<17x96xf32> to vector<17x8xf32>
    %108 = arith.truncf %107 : vector<17x8xf32> to vector<17x8xbf16>
    %cst_35 = arith.constant dense<0.000000e+00> : vector<17x17xf32>
    %109 = tpu.matmul %104, %106, %cst_35 {dimension_numbers = #tpu.dot_dimension_numbers<[1], [1], [0], [0], [0, 0, 1, 0], [], []>} : vector<17x8xbf16>, vector<17x8xbf16>, vector<17x17xf32> -> vector<17x17xf32>
    %cst_36 = arith.constant dense<0xFF800000> : vector<17xf32>
    %110 = vector.multi_reduction <maximumf>, %109, %cst_36 [1] : vector<17x17xf32> to vector<17xf32>
    %111 = vector.shape_cast %110 : vector<17xf32> to vector<17x1xf32>
    %112 = vector.broadcast %111 : vector<17x1xf32> to vector<17x17xf32>
    %113 = arith.subf %109, %112 : vector<17x17xf32>
    %114 = math.exp %113 : vector<17x17xf32>
    %cst_37 = arith.constant dense<0.000000e+00> : vector<17xf32>
    %115 = vector.multi_reduction <add>, %114, %cst_37 [1] : vector<17x17xf32> to vector<17xf32>
    %116 = vector.shape_cast %115 : vector<17xf32> to vector<17x1xf32>
    %117 = tpu.reciprocal %116 {approx = true} : vector<17x1xf32> -> vector<17x1xf32>
    %118 = arith.truncf %114 : vector<17x17xf32> to vector<17x17xbf16>
    %cst_38 = arith.constant dense<0.000000e+00> : vector<17x8xf32>
    %119 = tpu.matmul %118, %108, %cst_38 {dimension_numbers = #tpu.dot_dimension_numbers<[1], [0], [0], [1], [0, 0, 1, 1], [], []>} : vector<17x17xbf16>, vector<17x8xbf16>, vector<17x8xf32> -> vector<17x8xf32>
    %120 = vector.broadcast %117 : vector<17x1xf32> to vector<17x8xf32>
    %121 = arith.mulf %119, %120 : vector<17x8xf32>
    %122 = tpu.concatenate %58, %79, %100, %121 in 1 : vector<17x8xf32>, vector<17x8xf32>, vector<17x8xf32>, vector<17x8xf32> -> vector<17x32xf32>
    %123 = arith.truncf %122 : vector<17x32xf32> to vector<17x32xbf16>
    %c0_39 = arith.constant 0 : index
    %c0_40 = arith.constant 0 : index
    %c0_41 = arith.constant 0 : index
    %124 = vector.load %arg7[%c0_39, %c0_40, %c0_41] : memref<1x32x32xbf16, #tpu.memory_space<vmem>>, vector<1x32x32xbf16>
    %125 = vector.shape_cast %124 : vector<1x32x32xbf16> to vector<32x32xbf16>
    %cst_42 = arith.constant dense<0.000000e+00> : vector<17x32xf32>
    %126 = tpu.matmul %123, %125, %cst_42 {dimension_numbers = #tpu.dot_dimension_numbers<[1], [0], [0], [1], [0, 0, 1, 1], [], []>} : vector<17x32xbf16>, vector<32x32xbf16>, vector<17x32xf32> -> vector<17x32xf32>
    %127 = arith.addf %3, %126 : vector<17x32xf32>
    %c0_43 = arith.constant 0 : index
    %c0_44 = arith.constant 0 : index
    %c0_45 = arith.constant 0 : index
    %128 = vector.load %arg8[%c0_43, %c0_44, %c0_45] : memref<1x1x32xf32, #tpu.memory_space<vmem>>, vector<1x1x32xf32>
    %129 = vector.shape_cast %128 : vector<1x1x32xf32> to vector<1x32xf32>
    %130 = vector.broadcast %129 : vector<1x32xf32> to vector<17x32xf32>
    %131 = arith.addf %127, %130 : vector<17x32xf32>
    %c0_46 = arith.constant 0 : index
    %c0_47 = arith.constant 0 : index
    %c0_48 = arith.constant 0 : index
    %132 = vector.load %arg9[%c0_46, %c0_47, %c0_48] : memref<1x1x32xf32, #tpu.memory_space<vmem>>, vector<1x1x32xf32>
    %133 = vector.shape_cast %132 : vector<1x1x32xf32> to vector<1x32xf32>
    %c0_49 = arith.constant 0 : index
    %c0_50 = arith.constant 0 : index
    %c0_51 = arith.constant 0 : index
    %134 = vector.load %arg10[%c0_49, %c0_50, %c0_51] : memref<1x1x32xf32, #tpu.memory_space<vmem>>, vector<1x1x32xf32>
    %135 = vector.shape_cast %134 : vector<1x1x32xf32> to vector<1x32xf32>
    %cst_52 = arith.constant dense<0.000000e+00> : vector<17xf32>
    %136 = vector.multi_reduction <add>, %131, %cst_52 [1] : vector<17x32xf32> to vector<17xf32>
    %137 = vector.shape_cast %136 : vector<17xf32> to vector<17x1xf32>
    %cst_53 = arith.constant 3.200000e+01 : f32
    %138 = vector.broadcast %cst_53 : f32 to vector<17x1xf32>
    %139 = arith.divf %137, %138 : vector<17x1xf32>
    %140 = vector.broadcast %139 : vector<17x1xf32> to vector<17x32xf32>
    %141 = arith.subf %131, %140 : vector<17x32xf32>
    %142 = arith.mulf %141, %141 : vector<17x32xf32>
    %cst_54 = arith.constant dense<0.000000e+00> : vector<17xf32>
    %143 = vector.multi_reduction <add>, %142, %cst_54 [1] : vector<17x32xf32> to vector<17xf32>
    %144 = vector.shape_cast %143 : vector<17xf32> to vector<17x1xf32>
    %cst_55 = arith.constant 3.200000e+01 : f32
    %145 = vector.broadcast %cst_55 : f32 to vector<17x1xf32>
    %146 = arith.divf %144, %145 : vector<17x1xf32>
    %147 = vector.broadcast %139 : vector<17x1xf32> to vector<17x32xf32>
    %148 = arith.subf %131, %147 : vector<17x32xf32>
    %cst_56 = arith.constant 9.99999974E-6 : f32
    %149 = vector.broadcast %cst_56 : f32 to vector<17x1xf32>
    %150 = arith.addf %146, %149 : vector<17x1xf32>
    %151 = math.rsqrt %150 : vector<17x1xf32>
    %152 = vector.broadcast %151 : vector<17x1xf32> to vector<17x32xf32>
    %153 = arith.mulf %148, %152 : vector<17x32xf32>
    %154 = vector.broadcast %133 : vector<1x32xf32> to vector<17x32xf32>
    %155 = arith.mulf %153, %154 : vector<17x32xf32>
    %156 = vector.broadcast %135 : vector<1x32xf32> to vector<17x32xf32>
    %157 = arith.addf %155, %156 : vector<17x32xf32>
    %158 = arith.truncf %157 : vector<17x32xf32> to vector<17x32xbf16>
    %c0_57 = arith.constant 0 : index
    %c0_58 = arith.constant 0 : index
    %c0_59 = arith.constant 0 : index
    %159 = vector.load %arg11[%c0_57, %c0_58, %c0_59] : memref<1x32x64xbf16, #tpu.memory_space<vmem>>, vector<1x32x64xbf16>
    %160 = vector.shape_cast %159 : vector<1x32x64xbf16> to vector<32x64xbf16>
    %cst_60 = arith.constant dense<0.000000e+00> : vector<17x64xf32>
    %161 = tpu.matmul %158, %160, %cst_60 {dimension_numbers = #tpu.dot_dimension_numbers<[1], [0], [0], [1], [0, 0, 1, 1], [], []>} : vector<17x32xbf16>, vector<32x64xbf16>, vector<17x64xf32> -> vector<17x64xf32>
    %c0_61 = arith.constant 0 : index
    %c0_62 = arith.constant 0 : index
    %c0_63 = arith.constant 0 : index
    %162 = vector.load %arg12[%c0_61, %c0_62, %c0_63] : memref<1x1x64xf32, #tpu.memory_space<vmem>>, vector<1x1x64xf32>
    %163 = vector.shape_cast %162 : vector<1x1x64xf32> to vector<1x64xf32>
    %164 = vector.broadcast %163 : vector<1x64xf32> to vector<17x64xf32>
    %165 = arith.addf %161, %164 : vector<17x64xf32>
    %166 = arith.mulf %165, %165 : vector<17x64xf32>
    %167 = arith.mulf %165, %166 : vector<17x64xf32>
    %cst_64 = arith.constant 4.471500e-02 : f32
    %168 = vector.broadcast %cst_64 : f32 to vector<17x64xf32>
    %169 = arith.mulf %168, %167 : vector<17x64xf32>
    %170 = arith.addf %165, %169 : vector<17x64xf32>
    %cst_65 = arith.constant 0.797884583 : f32
    %171 = vector.broadcast %cst_65 : f32 to vector<17x64xf32>
    %172 = arith.mulf %171, %170 : vector<17x64xf32>
    %173 = math.tanh %172 : vector<17x64xf32>
    %cst_66 = arith.constant 1.000000e+00 : f32
    %174 = vector.broadcast %cst_66 : f32 to vector<17x64xf32>
    %175 = arith.addf %174, %173 : vector<17x64xf32>
    %cst_67 = arith.constant 5.000000e-01 : f32
    %176 = vector.broadcast %cst_67 : f32 to vector<17x64xf32>
    %177 = arith.mulf %176, %175 : vector<17x64xf32>
    %178 = arith.mulf %165, %177 : vector<17x64xf32>
    %179 = arith.truncf %178 : vector<17x64xf32> to vector<17x64xbf16>
    %c0_68 = arith.constant 0 : index
    %c0_69 = arith.constant 0 : index
    %c0_70 = arith.constant 0 : index
    %180 = vector.load %arg13[%c0_68, %c0_69, %c0_70] : memref<1x64x32xbf16, #tpu.memory_space<vmem>>, vector<1x64x32xbf16>
    %181 = vector.shape_cast %180 : vector<1x64x32xbf16> to vector<64x32xbf16>
    %cst_71 = arith.constant dense<0.000000e+00> : vector<17x32xf32>
    %182 = tpu.matmul %179, %181, %cst_71 {dimension_numbers = #tpu.dot_dimension_numbers<[1], [0], [0], [1], [0, 0, 1, 1], [], []>} : vector<17x64xbf16>, vector<64x32xbf16>, vector<17x32xf32> -> vector<17x32xf32>
    %c0_72 = arith.constant 0 : index
    %c0_73 = arith.constant 0 : index
    %c0_74 = arith.constant 0 : index
    %183 = vector.load %arg14[%c0_72, %c0_73, %c0_74] : memref<1x1x32xf32, #tpu.memory_space<vmem>>, vector<1x1x32xf32>
    %184 = vector.shape_cast %183 : vector<1x1x32xf32> to vector<1x32xf32>
    %185 = vector.broadcast %184 : vector<1x32xf32> to vector<17x32xf32>
    %186 = arith.addf %182, %185 : vector<17x32xf32>
    %187 = arith.addf %131, %186 : vector<17x32xf32>
    %c0_75 = arith.constant 0 : index
    %c0_76 = arith.constant 0 : index
    %188 = vector.load %arg16[%c0_75, %c0_76] : memref<17x32xf32, #tpu.memory_space<vmem>>, vector<17x32xf32>
    tpu.vector_store %arg16[%c0_75, %c0_76], %187 {strides = array<i32>} : memref<17x32xf32, #tpu.memory_space<vmem>>, vector<17x32xf32>,
    %c1_i32 = arith.constant 1 : i32
    %189 = arith.cmpi eq, %arg1, %c1_i32 : i32
    %190 = arith.extui %189 : i1 to i32
    %c0_i32_77 = arith.constant 0 : i32
    %191 = arith.cmpi ne, %190, %c0_i32_77 : i32
    scf.if %191 {
      %c0_78 = arith.constant 0 : index
      %c0_79 = arith.constant 0 : index
      %c0_80 = arith.constant 0 : index
      %192 = vector.load %arg15[%c0_78, %c0_79, %c0_80] : memref<1x17x32xf32, #tpu.memory_space<vmem>>, vector<1x17x32xf32>
      %193 = vector.shape_cast %192 : vector<1x17x32xf32> to vector<17x32xf32>
      %194 = vector.shape_cast %187 : vector<17x32xf32> to vector<1x17x32xf32>
      tpu.vector_store %arg15[%c0_78, %c0_79, %c0_80], %194 {strides = array<i32>} : memref<1x17x32xf32, #tpu.memory_space<vmem>>, vector<1x17x32xf32>,
    } else {
    }
    return
  }
  func.func @transform_0(%arg0: i32, %arg1: i32) -> (i32, i32, i32) {
    %c0_i32 = arith.constant 0 : i32
    %c0_i32_0 = arith.constant 0 : i32
    %c0_i32_1 = arith.constant 0 : i32
    return %arg0, %c0_i32, %c0_i32_0 : i32, i32, i32
  }
  func.func @transform_1(%arg0: i32, %arg1: i32) -> (i32, i32, i32) {
    %c0_i32 = arith.constant 0 : i32
    %c0_i32_0 = arith.constant 0 : i32
    %c0_i32_1 = arith.constant 0 : i32
    return %arg1, %c0_i32, %c0_i32_0 : i32, i32, i32
  }
  func.func @transform_2(%arg0: i32, %arg1: i32) -> (i32, i32, i32) {
    %c0_i32 = arith.constant 0 : i32
    %c0_i32_0 = arith.constant 0 : i32
    %c0_i32_1 = arith.constant 0 : i32
    return %arg1, %c0_i32, %c0_i32_0 : i32, i32, i32
  }
  func.func @transform_3(%arg0: i32, %arg1: i32) -> (i32, i32, i32) {
    %c0_i32 = arith.constant 0 : i32
    %c0_i32_0 = arith.constant 0 : i32
    %c0_i32_1 = arith.constant 0 : i32
    return %arg1, %c0_i32, %c0_i32_0 : i32, i32, i32
  }
  func.func @transform_4(%arg0: i32, %arg1: i32) -> (i32, i32, i32) {
    %c0_i32 = arith.constant 0 : i32
    %c0_i32_0 = arith.constant 0 : i32
    %c0_i32_1 = arith.constant 0 : i32
    return %arg1, %c0_i32, %c0_i32_0 : i32, i32, i32
  }
  func.func @transform_5(%arg0: i32, %arg1: i32) -> (i32, i32, i32) {
    %c0_i32 = arith.constant 0 : i32
    %c0_i32_0 = arith.constant 0 : i32
    %c0_i32_1 = arith.constant 0 : i32
    return %arg1, %c0_i32, %c0_i32_0 : i32, i32, i32
  }
  func.func @transform_6(%arg0: i32, %arg1: i32) -> (i32, i32, i32) {
    %c0_i32 = arith.constant 0 : i32
    %c0_i32_0 = arith.constant 0 : i32
    %c0_i32_1 = arith.constant 0 : i32
    return %arg1, %c0_i32, %c0_i32_0 : i32, i32, i32
  }
  func.func @transform_7(%arg0: i32, %arg1: i32) -> (i32, i32, i32) {
    %c0_i32 = arith.constant 0 : i32
    %c0_i32_0 = arith.constant 0 : i32
    %c0_i32_1 = arith.constant 0 : i32
    return %arg1, %c0_i32, %c0_i32_0 : i32, i32, i32
  }
  func.func @transform_8(%arg0: i32, %arg1: i32) -> (i32, i32, i32) {
    %c0_i32 = arith.constant 0 : i32
    %c0_i32_0 = arith.constant 0 : i32
    %c0_i32_1 = arith.constant 0 : i32
    return %arg1, %c0_i32, %c0_i32_0 : i32, i32, i32
  }
  func.func @transform_9(%arg0: i32, %arg1: i32) -> (i32, i32, i32) {
    %c0_i32 = arith.constant 0 : i32
    %c0_i32_0 = arith.constant 0 : i32
    %c0_i32_1 = arith.constant 0 : i32
    return %arg1, %c0_i32, %c0_i32_0 : i32, i32, i32
  }
  func.func @transform_10(%arg0: i32, %arg1: i32) -> (i32, i32, i32) {
    %c0_i32 = arith.constant 0 : i32
    %c0_i32_0 = arith.constant 0 : i32
    %c0_i32_1 = arith.constant 0 : i32
    return %arg1, %c0_i32, %c0_i32_0 : i32, i32, i32
  }
  func.func @transform_11(%arg0: i32, %arg1: i32) -> (i32, i32, i32) {
    %c0_i32 = arith.constant 0 : i32
    %c0_i32_0 = arith.constant 0 : i32
    %c0_i32_1 = arith.constant 0 : i32
    return %arg1, %c0_i32, %c0_i32_0 : i32, i32, i32
  }
  func.func @transform_12(%arg0: i32, %arg1: i32) -> (i32, i32, i32) {
    %c0_i32 = arith.constant 0 : i32
    %c0_i32_0 = arith.constant 0 : i32
    %c0_i32_1 = arith.constant 0 : i32
    return %arg1, %c0_i32, %c0_i32_0 : i32, i32, i32
  }
  func.func @transform_13(%arg0: i32, %arg1: i32) -> (i32, i32, i32) {
    %c0_i32 = arith.constant 0 : i32
    %c0_i32_0 = arith.constant 0 : i32
    %c0_i32_1 = arith.constant 0 : i32
    return %arg0, %c0_i32, %c0_i32_0 : i32, i32, i32
  }
}

module attributes {stable_mosaic.version = 11 : i64} {
  func.func @_head_kernel(%arg0: i32, %arg1: memref<2x32xf32, #tpu.memory_space<vmem>>, %arg2: memref<1x32xf32, #tpu.memory_space<vmem>>, %arg3: memref<1x32xf32, #tpu.memory_space<vmem>>, %arg4: memref<32x10xbf16, #tpu.memory_space<vmem>>, %arg5: memref<1x10xf32, #tpu.memory_space<vmem>>, %arg6: memref<2x10xf32, #tpu.memory_space<vmem>>) attributes {dimension_semantics = [#tpu.dimension_semantics<arbitrary>], iteration_bounds = array<i64: 1>, scalar_prefetch = 0 : i64, scratch_operands = 0 : i64, tpu.core_type = #tpu.core_type<tc>, window_params = [{pipeline_mode = #tpu.pipeline_mode<synchronous>, transform_indices = @transform_0, window_bounds = array<i64: 2, 32>}, {pipeline_mode = #tpu.pipeline_mode<synchronous>, transform_indices = @transform_1, window_bounds = array<i64: 1, 32>}, {pipeline_mode = #tpu.pipeline_mode<synchronous>, transform_indices = @transform_2, window_bounds = array<i64: 1, 32>}, {pipeline_mode = #tpu.pipeline_mode<synchronous>, transform_indices = @transform_3, window_bounds = array<i64: 32, 10>}, {pipeline_mode = #tpu.pipeline_mode<synchronous>, transform_indices = @transform_4, window_bounds = array<i64: 1, 10>}, {pipeline_mode = #tpu.pipeline_mode<synchronous>, transform_indices = @transform_5, window_bounds = array<i64: 2, 10>}]} {
    %c0 = arith.constant 0 : index
    %c0_0 = arith.constant 0 : index
    %0 = vector.load %arg1[%c0, %c0_0] : memref<2x32xf32, #tpu.memory_space<vmem>>, vector<2x32xf32>
    %c0_1 = arith.constant 0 : index
    %c0_2 = arith.constant 0 : index
    %1 = vector.load %arg2[%c0_1, %c0_2] : memref<1x32xf32, #tpu.memory_space<vmem>>, vector<1x32xf32>
    %c0_3 = arith.constant 0 : index
    %c0_4 = arith.constant 0 : index
    %2 = vector.load %arg3[%c0_3, %c0_4] : memref<1x32xf32, #tpu.memory_space<vmem>>, vector<1x32xf32>
    %cst = arith.constant dense<0.000000e+00> : vector<2xf32>
    %3 = vector.multi_reduction <add>, %0, %cst [1] : vector<2x32xf32> to vector<2xf32>
    %4 = vector.shape_cast %3 : vector<2xf32> to vector<2x1xf32>
    %cst_5 = arith.constant 3.200000e+01 : f32
    %5 = vector.broadcast %cst_5 : f32 to vector<2x1xf32>
    %6 = arith.divf %4, %5 : vector<2x1xf32>
    %7 = vector.broadcast %6 : vector<2x1xf32> to vector<2x32xf32>
    %8 = arith.subf %0, %7 : vector<2x32xf32>
    %9 = arith.mulf %8, %8 : vector<2x32xf32>
    %cst_6 = arith.constant dense<0.000000e+00> : vector<2xf32>
    %10 = vector.multi_reduction <add>, %9, %cst_6 [1] : vector<2x32xf32> to vector<2xf32>
    %11 = vector.shape_cast %10 : vector<2xf32> to vector<2x1xf32>
    %cst_7 = arith.constant 3.200000e+01 : f32
    %12 = vector.broadcast %cst_7 : f32 to vector<2x1xf32>
    %13 = arith.divf %11, %12 : vector<2x1xf32>
    %14 = vector.broadcast %6 : vector<2x1xf32> to vector<2x32xf32>
    %15 = arith.subf %0, %14 : vector<2x32xf32>
    %cst_8 = arith.constant 9.99999974E-6 : f32
    %16 = vector.broadcast %cst_8 : f32 to vector<2x1xf32>
    %17 = arith.addf %13, %16 : vector<2x1xf32>
    %18 = math.rsqrt %17 : vector<2x1xf32>
    %19 = vector.broadcast %18 : vector<2x1xf32> to vector<2x32xf32>
    %20 = arith.mulf %15, %19 : vector<2x32xf32>
    %21 = vector.broadcast %1 : vector<1x32xf32> to vector<2x32xf32>
    %22 = arith.mulf %20, %21 : vector<2x32xf32>
    %23 = vector.broadcast %2 : vector<1x32xf32> to vector<2x32xf32>
    %24 = arith.addf %22, %23 : vector<2x32xf32>
    %25 = arith.truncf %24 : vector<2x32xf32> to vector<2x32xbf16>
    %c0_9 = arith.constant 0 : index
    %c0_10 = arith.constant 0 : index
    %26 = vector.load %arg4[%c0_9, %c0_10] : memref<32x10xbf16, #tpu.memory_space<vmem>>, vector<32x10xbf16>
    %cst_11 = arith.constant dense<0.000000e+00> : vector<2x10xf32>
    %27 = tpu.matmul %25, %26, %cst_11 {dimension_numbers = #tpu.dot_dimension_numbers<[1], [0], [0], [1], [0, 0, 1, 1], [], []>} : vector<2x32xbf16>, vector<32x10xbf16>, vector<2x10xf32> -> vector<2x10xf32>
    %c0_12 = arith.constant 0 : index
    %c0_13 = arith.constant 0 : index
    %28 = vector.load %arg5[%c0_12, %c0_13] : memref<1x10xf32, #tpu.memory_space<vmem>>, vector<1x10xf32>
    %29 = vector.broadcast %28 : vector<1x10xf32> to vector<2x10xf32>
    %30 = arith.addf %27, %29 : vector<2x10xf32>
    %c0_14 = arith.constant 0 : index
    %c0_15 = arith.constant 0 : index
    %31 = vector.load %arg6[%c0_14, %c0_15] : memref<2x10xf32, #tpu.memory_space<vmem>>, vector<2x10xf32>
    tpu.vector_store %arg6[%c0_14, %c0_15], %30 {strides = array<i32>} : memref<2x10xf32, #tpu.memory_space<vmem>>, vector<2x10xf32>,
    return
  }
  func.func @transform_0(%arg0: i32) -> (i32, i32) {
    %c0_i32 = arith.constant 0 : i32
    %c0_i32_0 = arith.constant 0 : i32
    %c0_i32_1 = arith.constant 0 : i32
    return %c0_i32, %c0_i32_0 : i32, i32
  }
  func.func @transform_1(%arg0: i32) -> (i32, i32) {
    %c0_i32 = arith.constant 0 : i32
    %c0_i32_0 = arith.constant 0 : i32
    %c0_i32_1 = arith.constant 0 : i32
    return %c0_i32, %c0_i32_0 : i32, i32
  }
  func.func @transform_2(%arg0: i32) -> (i32, i32) {
    %c0_i32 = arith.constant 0 : i32
    %c0_i32_0 = arith.constant 0 : i32
    %c0_i32_1 = arith.constant 0 : i32
    return %c0_i32, %c0_i32_0 : i32, i32
  }
  func.func @transform_3(%arg0: i32) -> (i32, i32) {
    %c0_i32 = arith.constant 0 : i32
    %c0_i32_0 = arith.constant 0 : i32
    %c0_i32_1 = arith.constant 0 : i32
    return %c0_i32, %c0_i32_0 : i32, i32
  }
  func.func @transform_4(%arg0: i32) -> (i32, i32) {
    %c0_i32 = arith.constant 0 : i32
    %c0_i32_0 = arith.constant 0 : i32
    %c0_i32_1 = arith.constant 0 : i32
    return %c0_i32, %c0_i32_0 : i32, i32
  }
  func.func @transform_5(%arg0: i32) -> (i32, i32) {
    %c0_i32 = arith.constant 0 : i32
    %c0_i32_0 = arith.constant 0 : i32
    %c0_i32_1 = arith.constant 0 : i32
    return %c0_i32, %c0_i32_0 : i32, i32
  }
}

</mosaic_0001>

<llo_original>
// kernel: vit_model_forward.5
$region0: #{vit_model_forward.5}
  #allocation0 [shape = 'u32[]', space=smem, size = 0x4, offset = 0x4, fixed_abs, tag = 'smem constant byte address 0x4 - core index']
  #allocation1 [shape = 'u32[144,128]{1,0:T(1,128)}', space=vmem, size = 0x12000, scoped, tag = 'internal scratch']
  %s0 = inlined_call_operand.vmem [shape: f32[2,32], index: 0, kind: input, shape index: {}]
  %s1 = inlined_call_operand.vmem [shape: f32[1,32], index: 1, kind: input, shape index: {}]
  %s2 = inlined_call_operand.vmem [shape: f32[1,32], index: 2, kind: input, shape index: {}]
  %s3 = inlined_call_operand.vmem [shape: bf16[32,10], index: 3, kind: input, shape index: {}]
  %s4 = inlined_call_operand.vmem [shape: f32[1,10], index: 4, kind: input, shape index: {}]
  %s5 = inlined_call_operand.hbm [shape: f32[2,10], index: 5, kind: output, shape index: {}]
  %s6 = sld [smem:[#allocation0]]
  $region30: #{vit_model_forward.5} parent=0
    _
  %s8 = ssub.s32 1, %s6
  %s9 = scalar_select 0, %s8, %s6
  $region1: #{vit_model_forward.5} parent=0
    #allocation2 [shape = 'u8[1024]{0}', space=vmem, size = 0x400, scoped, tag = 'output window, operand 0, single buffered']
    #allocation3 [shape = 's32[1]{0}', space=sflag, size = 0x4, scoped, tag = 'scoped memory for vit_model_forward.5']
    %10 = vsyncpa [#allocation3], 0
    // Predicated region
    $region2: #{vit_model_forward.5} parent=1 // pred_check
      _
    $region3: #{vit_model_forward.5} parent=1 // pred_check_branch
      %12 = sbr.rel (0) target = $region5
    $region4: #{vit_model_forward.5} parent=1 // pred_region
      _
    $region5: #{vit_model_forward.5} parent=1 // pred_fallthru
      _
    // Predicated region
    $region6: #{vit_model_forward.5} parent=1 // pred_check
      _
    $region7: #{vit_model_forward.5} parent=1 // pred_check_branch
      %14 = sbr.rel (0) target = $region9
    $region8: #{vit_model_forward.5} parent=1 // pred_region
      _
    $region9: #{vit_model_forward.5} parent=1 // pred_fallthru
      _
    // Predicated region
    $region10: #{vit_model_forward.5} parent=1 // pred_check
      _
    $region11: #{vit_model_forward.5} parent=1 // pred_check_branch
      %16 = sbr.rel (0) target = $region13
    $region12: #{vit_model_forward.5} parent=1 // pred_region
      _
    $region13: #{vit_model_forward.5} parent=1 // pred_fallthru
      _
    // Predicated region
    $region14: #{vit_model_forward.5} parent=1 // pred_check
      _
    $region15: #{vit_model_forward.5} parent=1 // pred_check_branch
      %18 = sbr.rel (0) target = $region17
    $region16: #{vit_model_forward.5} parent=1 // pred_region
      _
    $region17: #{vit_model_forward.5} parent=1 // pred_fallthru
      _
    // Predicated region
    $region18: #{vit_model_forward.5} parent=1 // pred_check
      _
    $region19: #{vit_model_forward.5} parent=1 // pred_check_branch
      %20 = sbr.rel (0) target = $region21
    $region20: #{vit_model_forward.5} parent=1 // pred_region
      _
    $region21: #{vit_model_forward.5} parent=1 // pred_fallthru
      _
    %v22 = vld [vmem:[%s0] sm:$0x3]
    %v23 = vld [vmem:[%s1] sm:$0x1]
    %v24 = vld [vmem:[%s2] sm:$0x1]
    %vm25 = vcmask 254976
    %v26 = vsel %vm25, %v22, 0.0
    %27 = vadd.xlane.f32.xlu0 %v26
    %v28 = vpop.xlane.xlu0 %27
    %v29 = vrcp.pop 32.0
    %v30 = vmul.f32 %v28, %v29
    %v31 = vsub.f32 %v22, %v30
    %v32 = vmul.f32 %v31, %v31
    %v33 = vsel %vm25, %v32, 0.0
    %34 = vadd.xlane.f32.xlu0 %v33
    %v35 = vpop.xlane.xlu0 %34
    %v36 = vmul.f32 %v35, %v29
    %v37 = vadd.f32 %v36, 1e-05
    %v38 = vrsqrt.pop %v37
    %v39 = vmul.f32 %v31, %v38
    %v41 = vlaneseq
    %v42 = vshrl.u32 %v41, 7
    %v43 = vsub.s32 0, %v42
    %v44 = vrot.slane %v23, %v43
    %v46 = vmul.f32 %v39, %v44
    %v48 = vlaneseq
    %v49 = vshrl.u32 %v48, 7
    %v50 = vsub.s32 0, %v49
    %v51 = vrot.slane %v24, %v50
    %v53 = vadd.f32 %v46, %v51
    %v54 = vpack.c.bf16 %v53, %v53
    %v55 = vld [vmem:[%s3] sm:$0xf]
    %v56 = vld [vmem:[%s3 + $0x4] sm:$0xf]
    %v57 = vld [vmem:[%s3 + $0x8] sm:$0xf]
    %v58 = vld [vmem:[%s3 + $0xc] sm:$0xf]
    %v59 = vld [vmem:[%s4] sm:$0x1]
    %v61 = vlaneseq
    %v62 = vshrl.u32 %v61, 7
    %v63 = vsub.s32 0, %v62
    %v64 = vrot.slane %v59, %v63
    %v70 = vunpack.c.l.b16 %v55
    %v71 = vunpack.c.l.b16 %v56
    %v72 = vunpack.c.l.b16 %v57
    %v73 = vunpack.c.l.b16 %v58
    %v74 = vpack.c.b16 %v71, %v70
    %v75 = vpack.c.b16 %v73, %v72
    %vm78 = vcmask 261120
    %v80 = vsel %vm78, %v54, 0
    %82 = vmatprep.subr.bf16.mxu0 0
    %83 = vmatpush1.bf16.msra.mxu0 0
    %84 = vmatprep.subr.bf16.mxu0 0
    %85 = vmatpush1.bf16.msra.mxu0 0
    %86 = vmatprep.subr.bf16.mxu0 0
    %87 = vmatpush1.bf16.msra.mxu0 0
    %88 = vmatprep.subr.bf16.mxu0 0
    %89 = vmatpush1.bf16.msra.mxu0 0
    %90 = vmatprep.subr.bf16.mxu0 0
    %91 = vmatpush1.bf16.msra.mxu0 0
    %92 = vmatprep.subr.bf16.mxu0 0
    %93 = vmatpush1.bf16.msra.mxu0 0
    %94 = vmatprep.subr.bf16.mxu0 0
    %95 = vmatpush1.bf16.msra.mxu0 %v75
    %96 = vmatprep.subr.bf16.mxu0 0
    %97 = vmatpush1.bf16.msra.mxu0 %v74
    %98 = vmatprep.subr.bf16.mxu0 0
    %99 = vmatpush2.bf16.msra.mxu0 0
    %100 = vmatprep.subr.bf16.mxu0 0
    %101 = vmatpush2.bf16.msra.mxu0 0
    %102 = vmatprep.subr.bf16.mxu0 0
    %103 = vmatpush2.bf16.msra.mxu0 0
    %104 = vmatprep.subr.bf16.mxu0 0
    %105 = vmatpush2.bf16.msra.mxu0 0
    %106 = vmatprep.subr.bf16.mxu0 0
    %107 = vmatpush2.bf16.msra.mxu0 0
    %108 = vmatprep.subr.bf16.mxu0 0
    %109 = vmatpush2.bf16.msra.mxu0 0
    %110 = vmatprep.subr.bf16.mxu0 0
    %111 = vmatpush2.bf16.msra.mxu0 0
    %112 = vmatprep.subr.bf16.mxu0 0
    %113 = vmatpush2.bf16.msra.mxu0 0
    %114 = vmatprep.mubr.bf16.mxu0 0
    %115 = vmatmul.mubr.bf16.gmra.mxu0 %v80
    %v116 = vpop.f32.mrf.mxu0
    %v117 = vadd.f32 %v64, %v116
    %v118 = vpop.f32.mrf.mxu0
    %v119 = vpop.f32.mrf.mxu0
    %v120 = vpop.f32.mrf.mxu0
    %121 = vdwg.mxu0
    %vm122 = vcmask 74752
    %123 = vst.msk [vmem:[#allocation2] sm:$0x3] %vm122, %v117
    // Predicated region
    $region22: #{vit_model_forward.5} parent=1 // pred_check
      _
    $region23: #{vit_model_forward.5} parent=1 // pred_check_branch
      %125 = sbr.rel (0) target = $region25
    $region24: #{vit_model_forward.5} parent=1 // pred_region
      %s127 = ssub.s32 32, 32
      %128 = vsyncadd [#allocation3], %s127
      %s130 = sshll.u32 [#allocation2], 4
      %s131 = int_to_ptr.vmem [resolvable:$true] %s130
      %133 = dma.vmem_to_hbm [thread:$0]  %s131, 32, %s5, [#allocation3]
    $region25: #{vit_model_forward.5} parent=1 // pred_fallthru
      _
    // Predicated region
    $region26: #{vit_model_forward.5} parent=1 // pred_check
      _
    $region27: #{vit_model_forward.5} parent=1 // pred_check_branch
      %135 = sbr.rel (0) target = $region29
    $region28: #{vit_model_forward.5} parent=1 // pred_region
      %136 = dma.done [#allocation3], 32
    $region29: #{vit_model_forward.5} parent=1 // pred_fallthru
      _
    %137 = vsyncpa [#allocation3], 1

// kernel: vit_model_forward.3
$region0: #{vit_model_forward.3}
  #allocation0 [shape = 'u32[]', space=smem, size = 0x4, offset = 0x4, fixed_abs, tag = 'smem constant byte address 0x4 - core index']
  #allocation1 [shape = 'u32[144,128]{1,0:T(1,128)}', space=vmem, size = 0x12000, scoped, tag = 'internal scratch']
  %s0 = inlined_call_operand.vmem [shape: f32[2,17,64], index: 0, kind: input, shape index: {}]
  %s1 = inlined_call_operand.vmem [shape: bf16[64,32], index: 1, kind: input, shape index: {}]
  %s2 = inlined_call_operand.vmem [shape: f32[17,32], index: 2, kind: input, shape index: {}]
  %s3 = inlined_call_operand.vmem [shape: f32[2,17,32], index: 3, kind: output, shape index: {}]
  %s4 = sld [smem:[#allocation0]]
  $region45: #{vit_model_forward.3} parent=0
    _
  %s6 = ssub.s32 1, %s4
  %s7 = scalar_select 0, %s6, %s4
  loop: start=0, step=1, limit=4
  $region2: #{vit_model_forward.3} parent=0 // loop_pre_header
    _
  $region3: #{vit_model_forward.3} parent=0 // loop_header
    %s9 = sphi 0, %s13
    %p10 = scmp.ge.s32.totalorder %s9, 4
    %s19 = sphi 0, %s21
    %s22 = sphi 0, %s19
    %s23 = sphi 0, %s22
    %s39 = sphi 0, %s23
    %s43 = sphi 0, %s43
    %s45 = sphi 0, %s43
    %s46 = sphi 0, %s45
    %s60 = sphi 0, %s46
    %s64 = sphi 0, %s64
    %s66 = sphi 0, %s64
    %s67 = sphi 0, %s66
    %s81 = sphi 0, %s67
    %s87 = sphi 0, %s89
    %s90 = sphi 0, %s87
    %s91 = sphi 0, %s90
    %s107 = sphi 0, %s91
  $region4: #{vit_model_forward.3} parent=0 // loop_header_branch
    %12 = sbr.rel (%p10) target = $region8
  $region5: #{vit_model_forward.3} parent=0 // loop_body
    %s14 = ssub.s32 %s9, 1
    %s15 = ssub.s32 %s9, 2
    %s16 = sadd.s32 %s9, 1
    %s17 = ssub.s32 %s9, %s16
    %p18 = scmp.eq.s32.totalorder %s17, 0
    %s20 = sadd.s32 %s19, 1
    %s21 = scalar_select %p18, %s19, %s20
    %p24 = pneg %p18
    %p25 = scmp.eq.s32.totalorder %s9, 1
    %p26 = por %p24, %p25
    %p27 = scmp.ne.s32.totalorder %s19, %s22
    %p28 = scmp.eq.s32.totalorder %s9, 0
    %p29 = por %p27, %p28
    %p30 = scmp.ne.s32.totalorder %s19, %s22
    %p31 = scmp.eq.s32.totalorder %s14, 1
    %p32 = por %p30, %p31
    %p33 = scmp.ne.s32.totalorder %s22, %s23
    %p34 = scmp.eq.s32.totalorder %s14, 0
    %p35 = por %p33, %p34
    %p36 = scmp.ne.s32.totalorder %s22, %s23
    %p37 = scmp.eq.s32.totalorder %s15, 1
    %p38 = por %p36, %p37
    %p40 = scmp.ne.s32.totalorder %s23, %s39
    %p41 = scmp.eq.s32.totalorder %s15, 0
    %p42 = por %p40, %p41
    %s44 = sadd.s32 %s43, 1
    %p47 = scmp.eq.s32.totalorder %s9, 1
    %p48 = scmp.ne.s32.totalorder %s43, %s45
    %p49 = scmp.eq.s32.totalorder %s9, 0
    %p50 = por %p48, %p49
    %p51 = scmp.ne.s32.totalorder %s43, %s45
    %p52 = scmp.eq.s32.totalorder %s14, 1
    %p53 = por %p51, %p52
    %p54 = scmp.ne.s32.totalorder %s45, %s46
    %p55 = scmp.eq.s32.totalorder %s14, 0
    %p56 = por %p54, %p55
    %p57 = scmp.ne.s32.totalorder %s45, %s46
    %p58 = scmp.eq.s32.totalorder %s15, 1
    %p59 = por %p57, %p58
    %p61 = scmp.ne.s32.totalorder %s46, %s60
    %p62 = scmp.eq.s32.totalorder %s15, 0
    %p63 = por %p61, %p62
    %s65 = sadd.s32 %s64, 1
    %p68 = scmp.eq.s32.totalorder %s9, 1
    %p69 = scmp.ne.s32.totalorder %s64, %s66
    %p70 = scmp.eq.s32.totalorder %s9, 0
    %p71 = por %p69, %p70
    %p72 = scmp.ne.s32.totalorder %s64, %s66
    %p73 = scmp.eq.s32.totalorder %s14, 1
    %p74 = por %p72, %p73
    %p75 = scmp.ne.s32.totalorder %s66, %s67
    %p76 = scmp.eq.s32.totalorder %s14, 0
    %p77 = por %p75, %p76
    %p78 = scmp.ne.s32.totalorder %s66, %s67
    %p79 = scmp.eq.s32.totalorder %s15, 1
    %p80 = por %p78, %p79
    %p82 = scmp.ne.s32.totalorder %s67, %s81
    %p83 = scmp.eq.s32.totalorder %s15, 0
    %p84 = por %p82, %p83
    %s85 = ssub.s32 %s9, %s16
    %p86 = scmp.eq.s32.totalorder %s85, 0
    %s88 = sadd.s32 %s87, 1
    %s89 = scalar_select %p86, %s87, %s88
    %p92 = pneg %p86
    %p93 = scmp.eq.s32.totalorder %s9, 1
    %p94 = por %p92, %p93
    %p95 = scmp.ne.s32.totalorder %s87, %s90
    %p96 = scmp.eq.s32.totalorder %s9, 0
    %p97 = por %p95, %p96
    %p98 = scmp.ne.s32.totalorder %s87, %s90
    %p99 = scmp.eq.s32.totalorder %s14, 1
    %p100 = por %p98, %p99
    %p101 = scmp.ne.s32.totalorder %s90, %s91
    %p102 = scmp.eq.s32.totalorder %s14, 0
    %p103 = por %p101, %p102
    %p104 = scmp.ne.s32.totalorder %s90, %s91
    %p105 = scmp.eq.s32.totalorder %s15, 1
    %p106 = por %p104, %p105
    %p108 = scmp.ne.s32.totalorder %s91, %s107
    %p109 = scmp.eq.s32.totalorder %s15, 0
    %p110 = por %p108, %p109
    %p111 = scmp.le.s32.totalorder 1, %s9
    %p112 = scmp.lt.s32.totalorder %s9, 3
    %p113 = pnand %p111, %p112
    %p114 = pneg %p113
    // Predicated region
    $region9: #{vit_model_forward.3} parent=5 // pred_check
      _
    $region10: #{vit_model_forward.3} parent=5 // pred_check_branch
      %116 = sbr.rel (%p113) target = $region12
    $region11: #{vit_model_forward.3} parent=5 // pred_region
      %s117 = ssub.s32 %s9, 1
      // Predicated region
      $region13: #{vit_model_forward.3} parent=11 // pred_check
        %p118 = pneg %p56
      $region14: #{vit_model_forward.3} parent=11 // pred_check_branch
        %120 = sbr.rel (%p118) target = $region16
      $region15: #{vit_model_forward.3} parent=11 // pred_region
        _
      $region16: #{vit_model_forward.3} parent=11 // pred_fallthru
        _
      // Predicated region
      $region17: #{vit_model_forward.3} parent=11 // pred_check
        %p121 = pneg %p77
      $region18: #{vit_model_forward.3} parent=11 // pred_check_branch
        %123 = sbr.rel (%p121) target = $region20
      $region19: #{vit_model_forward.3} parent=11 // pred_region
        _
      $region20: #{vit_model_forward.3} parent=11 // pred_fallthru
        _
    $region12: #{vit_model_forward.3} parent=5 // pred_fallthru
      _
    %p124 = scmp.lt.s32.totalorder %s9, 2
    // Predicated region
    $region21: #{vit_model_forward.3} parent=5 // pred_check
      %p125 = pneg %p124
    $region22: #{vit_model_forward.3} parent=5 // pred_check_branch
      %127 = sbr.rel (%p125) target = $region24
    $region23: #{vit_model_forward.3} parent=5 // pred_region
      // Predicated region
      $region25: #{vit_model_forward.3} parent=23 // pred_check
        %p128 = pneg %p29
      $region26: #{vit_model_forward.3} parent=23 // pred_check_branch
        %130 = sbr.rel (%p128) target = $region28
      $region27: #{vit_model_forward.3} parent=23 // pred_region
        %p131 = scmp.lt.s32.totalorder %s9, 1
        %s132 = scalar_select %p131, %s9, 1
        %s133 = smul.addr %s132, 3
        %s134 = smul.addr %s133, 8
        %s135 = scalar_lea.vmem %s0, %s134
      $region28: #{vit_model_forward.3} parent=23 // pred_fallthru
        _
    $region24: #{vit_model_forward.3} parent=5 // pred_fallthru
      _
    %p136 = scmp.le.s32.totalorder 1, %s9
    %p137 = scmp.lt.s32.totalorder %s9, 3
    %p138 = pnand %p136, %p137
    %p139 = pneg %p138
    // Predicated region
    $region29: #{vit_model_forward.3} parent=5 // pred_check
      _
    $region30: #{vit_model_forward.3} parent=5 // pred_check_branch
      %141 = sbr.rel (%p138) target = $region32
    $region31: #{vit_model_forward.3} parent=5 // pred_region
      %s142 = ssub.s32 %s9, 1
      %p143 = scmp.lt.s32.totalorder %s14, 1
      %s144 = scalar_select %p143, %s14, 1
      %s145 = smul.addr %s144, 3
      %s146 = smul.addr %s145, 8
      %s147 = scalar_lea.vmem %s0, %s146
      %p148 = pneg %p35
      %p149 = pneg %p32
      %p150 = pneg %p56
      %p151 = pneg %p53
      %p152 = pneg %p77
      %p153 = pneg %p74
      %p154 = pneg %p103
      %p155 = pneg %p100
      %p156 = scmp.lt.s32.totalorder %s14, 1
      %s157 = scalar_select %p156, %s14, 1
      %s158 = smul.addr %s157, 3
      %s159 = smul.addr %s158, 8
      %s160 = scalar_lea.vmem %s3, %s159
      %p161 = scmp.lt.s32.totalorder %s14, 1
      %s162 = scalar_select %p161, %s14, 1
      %s163 = smul.addr %s162, 3
      %s164 = smul.addr %s163, 8
      %s165 = scalar_lea.vmem %s0, %s164
      %p166 = scmp.lt.s32.totalorder %s14, 1
      %s167 = scalar_select %p166, %s14, 1
      %s168 = smul.addr %s167, 3
      %s169 = smul.addr %s168, 8
      %s170 = scalar_lea.vmem %s3, %s169
      %v172 = vld [vmem:[%s165] sm:$0xff]
      %v173 = vld [vmem:[%s165 + $0x8] sm:$0xff]
      %v174 = vld [vmem:[%s165 + $0x10] sm:$0x1]
      %v175 = vpack.c.bf16 %v173, %v172
      %v176 = vpack.c.bf16 %v174, %v174
      %v177 = vld [vmem:[%s1] sm:$0xf]
      %v178 = vld [vmem:[%s1 + $0x4] sm:$0xf]
      %v179 = vld [vmem:[%s1 + $0x8] sm:$0xf]
      %v180 = vld [vmem:[%s1 + $0xc] sm:$0xf]
      %v181 = vld [vmem:[%s1 + $0x10] sm:$0xf]
      %v182 = vld [vmem:[%s1 + $0x14] sm:$0xf]
      %v183 = vld [vmem:[%s1 + $0x18] sm:$0xf]
      %v184 = vld [vmem:[%s1 + $0x1c] sm:$0xf]
      %v185 = vld [vmem:[%s2] sm:$0xff]
      %v186 = vld [vmem:[%s2 + $0x8] sm:$0xff]
      %v187 = vld [vmem:[%s2 + $0x10] sm:$0x1]
      %v196 = vunpack.c.l.b16 %v177
      %v197 = vunpack.c.l.b16 %v178
      %v198 = vunpack.c.l.b16 %v179
      %v199 = vunpack.c.l.b16 %v180
      %v200 = vunpack.c.l.b16 %v181
      %v201 = vunpack.c.l.b16 %v182
      %v202 = vunpack.c.l.b16 %v183
      %v203 = vunpack.c.l.b16 %v184
      %v204 = vpack.c.b16 %v197, %v196
      %v205 = vpack.c.b16 %v199, %v198
      %v206 = vpack.c.b16 %v201, %v200
      %v207 = vpack.c.b16 %v203, %v202
      %vm212 = vcmask 523264
      %v214 = vsel %vm212, %v175, 0
      %v217 = vsel %vm212, %v176, 0
      %219 = vmatprep.subr.bf16.mxu0 0
      %220 = vmatpush1.bf16.msra.mxu0 0
      %221 = vmatprep.subr.bf16.mxu0 0
      %222 = vmatpush1.bf16.msra.mxu0 0
      %223 = vmatprep.subr.bf16.mxu0 0
      %224 = vmatpush1.bf16.msra.mxu0 0
      %225 = vmatprep.subr.bf16.mxu0 0
      %226 = vmatpush1.bf16.msra.mxu0 0
      %227 = vmatprep.subr.bf16.mxu0 0
      %228 = vmatpush1.bf16.msra.mxu0 %v207
      %229 = vmatprep.subr.bf16.mxu0 0
      %230 = vmatpush1.bf16.msra.mxu0 %v206
      %231 = vmatprep.subr.bf16.mxu0 0
      %232 = vmatpush1.bf16.msra.mxu0 %v205
      %233 = vmatprep.subr.bf16.mxu0 0
      %234 = vmatpush1.bf16.msra.mxu0 %v204
      %235 = vmatprep.subr.bf16.mxu0 0
      %236 = vmatpush2.bf16.msra.mxu0 0
      %237 = vmatprep.subr.bf16.mxu0 0
      %238 = vmatpush2.bf16.msra.mxu0 0
      %239 = vmatprep.subr.bf16.mxu0 0
      %240 = vmatpush2.bf16.msra.mxu0 0
      %241 = vmatprep.subr.bf16.mxu0 0
      %242 = vmatpush2.bf16.msra.mxu0 0
      %243 = vmatprep.subr.bf16.mxu0 0
      %244 = vmatpush2.bf16.msra.mxu0 0
      %245 = vmatprep.subr.bf16.mxu0 0
      %246 = vmatpush2.bf16.msra.mxu0 0
      %247 = vmatprep.subr.bf16.mxu0 0
      %248 = vmatpush2.bf16.msra.mxu0 0
      %249 = vmatprep.subr.bf16.mxu0 0
      %250 = vmatpush2.bf16.msra.mxu0 0
      %251 = vmatprep.mubr.bf16.mxu0 0
      %252 = vmatmul.mubr.bf16.gmra.mxu0 %v214
      %v253 = vpop.f32.mrf.mxu0
      %v254 = vadd.f32 %v185, %v253
      %v255 = vpop.f32.mrf.mxu0
      %v256 = vpop.f32.mrf.mxu0
      %v257 = vadd.f32 %v186, %v256
      %v258 = vpop.f32.mrf.mxu0
      %259 = vmatprep.mubr.bf16.mxu0 0
      %260 = vmatmul.mubr.bf16.gmra.mxu0 %v217
      %v261 = vpop.f32.mrf.mxu0
      %v262 = vadd.f32 %v187, %v261
      %v263 = vpop.f32.mrf.mxu0
      %v264 = vpop.f32.mrf.mxu0
      %v265 = vpop.f32.mrf.mxu0
      %266 = vdwg.mxu0
      %vm267 = vcmask 261120
      %268 = vst.msk [vmem:[%s170] sm:$0xff] %vm267, %v254
      %269 = vst.msk [vmem:[%s170 + $0x8] sm:$0xff] %vm267, %v257
      %vm270 = vcmask 253952
      %271 = vst.msk [vmem:[%s170 + $0x10] sm:$0x1] %vm270, %v262
      %p272 = scmp.lt.s32.totalorder %s14, 1
      %s273 = scalar_select %p272, %s14, 1
      %s274 = smul.addr %s273, 3
      %s275 = smul.addr %s274, 8
      %s276 = scalar_lea.vmem %s3, %s275
      // Predicated region
      $region33: #{vit_model_forward.3} parent=31 // pred_check
        %p277 = pneg %p100
      $region34: #{vit_model_forward.3} parent=31 // pred_check_branch
        %279 = sbr.rel (%p277) target = $region36
      $region35: #{vit_model_forward.3} parent=31 // pred_region
        _
      $region36: #{vit_model_forward.3} parent=31 // pred_fallthru
        _
    $region32: #{vit_model_forward.3} parent=5 // pred_fallthru
      _
    %p280 = scmp.le.s32.totalorder 2, %s9
    // Predicated region
    $region37: #{vit_model_forward.3} parent=5 // pred_check
      %p281 = pneg %p280
    $region38: #{vit_model_forward.3} parent=5 // pred_check_branch
      %283 = sbr.rel (%p281) target = $region40
    $region39: #{vit_model_forward.3} parent=5 // pred_region
      %s284 = ssub.s32 %s9, 2
      // Predicated region
      $region41: #{vit_model_forward.3} parent=39 // pred_check
        %p285 = pneg %p106
      $region42: #{vit_model_forward.3} parent=39 // pred_check_branch
        %287 = sbr.rel (%p285) target = $region44
      $region43: #{vit_model_forward.3} parent=39 // pred_region
        %p288 = scmp.lt.s32.totalorder %s15, 1
        %s289 = scalar_select %p288, %s15, 1
        %s290 = smul.addr %s289, 3
        %s291 = smul.addr %s290, 8
        %s292 = scalar_lea.vmem %s3, %s291
      $region44: #{vit_model_forward.3} parent=39 // pred_fallthru
        _
    $region40: #{vit_model_forward.3} parent=5 // pred_fallthru
      _
  $region6: #{vit_model_forward.3} parent=0 // loop_footer
    %s13 = sadd.s32 1, %s9
  $region7: #{vit_model_forward.3} parent=0 // loop_footer_branch
    %8 = sbr.rel target = $region3
  $region8: #{vit_model_forward.3} parent=0 // loop_exit
    _

// kernel: vit_model_forward.4
$region0: #{vit_model_forward.4}
  #allocation0 [shape = 'u32[]', space=smem, size = 0x4, offset = 0x4, fixed_abs, tag = 'smem constant byte address 0x4 - core index']
  #allocation1 [shape = 'u32[144,128]{1,0:T(1,128)}', space=vmem, size = 0x12000, scoped, tag = 'internal scratch']
  #allocation2 [shape = 'f32[17,32]{1,0:T(8,128)}', space=vmem, size = 0x3000, scoped, tag = 'scratch operand']
  %s0 = inlined_call_operand.vmem [shape: f32[2,17,32], index: 0, kind: input, shape index: {}]
  %s1 = inlined_call_operand.vmem [shape: f32[2,1,32], index: 1, kind: input, shape index: {}]
  %s2 = inlined_call_operand.vmem [shape: f32[2,1,32], index: 2, kind: input, shape index: {}]
  %s3 = inlined_call_operand.vmem [shape: bf16[2,32,96], index: 3, kind: input, shape index: {}]
  %s4 = inlined_call_operand.vmem [shape: f32[2,1,96], index: 4, kind: input, shape index: {}]
  %s5 = inlined_call_operand.vmem [shape: bf16[2,32,32], index: 5, kind: input, shape index: {}]
  %s6 = inlined_call_operand.vmem [shape: f32[2,1,32], index: 6, kind: input, shape index: {}]
  %s7 = inlined_call_operand.vmem [shape: f32[2,1,32], index: 7, kind: input, shape index: {}]
  %s8 = inlined_call_operand.vmem [shape: f32[2,1,32], index: 8, kind: input, shape index: {}]
  %s9 = inlined_call_operand.vmem [shape: bf16[2,32,64], index: 9, kind: input, shape index: {}]
  %s10 = inlined_call_operand.vmem [shape: f32[2,1,64], index: 10, kind: input, shape index: {}]
  %s11 = inlined_call_operand.vmem [shape: bf16[2,64,32], index: 11, kind: input, shape index: {}]
  %s12 = inlined_call_operand.vmem [shape: f32[2,1,32], index: 12, kind: input, shape index: {}]
  %s13 = inlined_call_operand.vmem [shape: f32[2,17,32], index: 13, kind: output, shape index: {}]
  %s14 = sld [smem:[#allocation0]]
  $region93: #{vit_model_forward.4} parent=0
    _
  %s16 = ssub.s32 1, %s14
  %s17 = scalar_select 0, %s16, %s14
  loop: start=0, step=1, limit=6
  $region2: #{vit_model_forward.4} parent=0 // loop_pre_header
    _
  $region3: #{vit_model_forward.4} parent=0 // loop_header
    %s19 = sphi 0, %s23
    %p20 = scmp.ge.s32.totalorder %s19, 6
    %s26 = sphi 0, %s38
    %s27 = sphi 0, %s34
    %s28 = sphi 0, %s26
    %s29 = sphi 0, %s27
    %s30 = sphi 0, %s28
    %s31 = sphi 0, %s29
    %s41 = sphi 0, %s43
    %s44 = sphi 0, %s41
    %s45 = sphi 0, %s44
    %s61 = sphi 0, %s45
    %s67 = sphi 0, %s69
    %s70 = sphi 0, %s67
    %s71 = sphi 0, %s70
    %s87 = sphi 0, %s71
    %s93 = sphi 0, %s95
    %s96 = sphi 0, %s93
    %s97 = sphi 0, %s96
    %s113 = sphi 0, %s97
    %s119 = sphi 0, %s121
    %s122 = sphi 0, %s119
    %s123 = sphi 0, %s122
    %s139 = sphi 0, %s123
    %s145 = sphi 0, %s147
    %s148 = sphi 0, %s145
    %s149 = sphi 0, %s148
    %s165 = sphi 0, %s149
    %s171 = sphi 0, %s173
    %s174 = sphi 0, %s171
    %s175 = sphi 0, %s174
    %s191 = sphi 0, %s175
    %s197 = sphi 0, %s199
    %s200 = sphi 0, %s197
    %s201 = sphi 0, %s200
    %s217 = sphi 0, %s201
    %s223 = sphi 0, %s225
    %s226 = sphi 0, %s223
    %s227 = sphi 0, %s226
    %s243 = sphi 0, %s227
    %s249 = sphi 0, %s251
    %s252 = sphi 0, %s249
    %s253 = sphi 0, %s252
    %s269 = sphi 0, %s253
    %s275 = sphi 0, %s277
    %s278 = sphi 0, %s275
    %s279 = sphi 0, %s278
    %s295 = sphi 0, %s279
    %s301 = sphi 0, %s303
    %s304 = sphi 0, %s301
    %s305 = sphi 0, %s304
    %s321 = sphi 0, %s305
    %s327 = sphi 0, %s329
    %s330 = sphi 0, %s327
    %s331 = sphi 0, %s330
    %s347 = sphi 0, %s331
    %s353 = sphi 0, %s355
    %s356 = sphi 0, %s353
    %s357 = sphi 0, %s356
    %s373 = sphi 0, %s357
    %s379 = sphi 0, %s381
    %s382 = sphi 0, %s379
    %s383 = sphi 0, %s382
    %s399 = sphi 0, %s383
  $region4: #{vit_model_forward.4} parent=0 // loop_header_branch
    %22 = sbr.rel (%p20) target = $region8
  $region5: #{vit_model_forward.4} parent=0 // loop_body
    %s24 = ssub.s32 %s19, 1
    %s25 = ssub.s32 %s19, 2
    %s32 = sadd.s32 1, %s27
    %p33 = scmp.ge.s32.totalorder %s32, 2
    %s34 = scalar_select %p33, 0, %s32
    %s35 = sadd.s32 1, %s26
    %s36 = scalar_select %p33, %s35, %s26
    %p37 = scmp.ge.s32.totalorder %s36, 2
    %s38 = scalar_select %p37, 0, %s36
    %s39 = ssub.s32 %s26, %s38
    %p40 = scmp.eq.s32.totalorder %s39, 0
    %s42 = sadd.s32 %s41, 1
    %s43 = scalar_select %p40, %s41, %s42
    %p46 = pneg %p40
    %p47 = scmp.eq.s32.totalorder %s19, 3
    %p48 = por %p46, %p47
    %p49 = scmp.ne.s32.totalorder %s41, %s44
    %p50 = scmp.eq.s32.totalorder %s19, 0
    %p51 = por %p49, %p50
    %p52 = scmp.ne.s32.totalorder %s41, %s44
    %p53 = scmp.eq.s32.totalorder %s24, 3
    %p54 = por %p52, %p53
    %p55 = scmp.ne.s32.totalorder %s44, %s45
    %p56 = scmp.eq.s32.totalorder %s24, 0
    %p57 = por %p55, %p56
    %p58 = scmp.ne.s32.totalorder %s44, %s45
    %p59 = scmp.eq.s32.totalorder %s25, 3
    %p60 = por %p58, %p59
    %p62 = scmp.ne.s32.totalorder %s45, %s61
    %p63 = scmp.eq.s32.totalorder %s25, 0
    %p64 = por %p62, %p63
    %s65 = ssub.s32 %s27, %s34
    %p66 = scmp.eq.s32.totalorder %s65, 0
    %s68 = sadd.s32 %s67, 1
    %s69 = scalar_select %p66, %s67, %s68
    %p72 = pneg %p66
    %p73 = scmp.eq.s32.totalorder %s19, 3
    %p74 = por %p72, %p73
    %p75 = scmp.ne.s32.totalorder %s67, %s70
    %p76 = scmp.eq.s32.totalorder %s19, 0
    %p77 = por %p75, %p76
    %p78 = scmp.ne.s32.totalorder %s67, %s70
    %p79 = scmp.eq.s32.totalorder %s24, 3
    %p80 = por %p78, %p79
    %p81 = scmp.ne.s32.totalorder %s70, %s71
    %p82 = scmp.eq.s32.totalorder %s24, 0
    %p83 = por %p81, %p82
    %p84 = scmp.ne.s32.totalorder %s70, %s71
    %p85 = scmp.eq.s32.totalorder %s25, 3
    %p86 = por %p84, %p85
    %p88 = scmp.ne.s32.totalorder %s71, %s87
    %p89 = scmp.eq.s32.totalorder %s25, 0
    %p90 = por %p88, %p89
    %s91 = ssub.s32 %s27, %s34
    %p92 = scmp.eq.s32.totalorder %s91, 0
    %s94 = sadd.s32 %s93, 1
    %s95 = scalar_select %p92, %s93, %s94
    %p98 = pneg %p92
    %p99 = scmp.eq.s32.totalorder %s19, 3
    %p100 = por %p98, %p99
    %p101 = scmp.ne.s32.totalorder %s93, %s96
    %p102 = scmp.eq.s32.totalorder %s19, 0
    %p103 = por %p101, %p102
    %p104 = scmp.ne.s32.totalorder %s93, %s96
    %p105 = scmp.eq.s32.totalorder %s24, 3
    %p106 = por %p104, %p105
    %p107 = scmp.ne.s32.totalorder %s96, %s97
    %p108 = scmp.eq.s32.totalorder %s24, 0
    %p109 = por %p107, %p108
    %p110 = scmp.ne.s32.totalorder %s96, %s97
    %p111 = scmp.eq.s32.totalorder %s25, 3
    %p112 = por %p110, %p111
    %p114 = scmp.ne.s32.totalorder %s97, %s113
    %p115 = scmp.eq.s32.totalorder %s25, 0
    %p116 = por %p114, %p115
    %s117 = ssub.s32 %s27, %s34
    %p118 = scmp.eq.s32.totalorder %s117, 0
    %s120 = sadd.s32 %s119, 1
    %s121 = scalar_select %p118, %s119, %s120
    %p124 = pneg %p118
    %p125 = scmp.eq.s32.totalorder %s19, 3
    %p126 = por %p124, %p125
    %p127 = scmp.ne.s32.totalorder %s119, %s122
    %p128 = scmp.eq.s32.totalorder %s19, 0
    %p129 = por %p127, %p128
    %p130 = scmp.ne.s32.totalorder %s119, %s122
    %p131 = scmp.eq.s32.totalorder %s24, 3
    %p132 = por %p130, %p131
    %p133 = scmp.ne.s32.totalorder %s122, %s123
    %p134 = scmp.eq.s32.totalorder %s24, 0
    %p135 = por %p133, %p134
    %p136 = scmp.ne.s32.totalorder %s122, %s123
    %p137 = scmp.eq.s32.totalorder %s25, 3
    %p138 = por %p136, %p137
    %p140 = scmp.ne.s32.totalorder %s123, %s139
    %p141 = scmp.eq.s32.totalorder %s25, 0
    %p142 = por %p140, %p141
    %s143 = ssub.s32 %s27, %s34
    %p144 = scmp.eq.s32.totalorder %s143, 0
    %s146 = sadd.s32 %s145, 1
    %s147 = scalar_select %p144, %s145, %s146
    %p150 = pneg %p144
    %p151 = scmp.eq.s32.totalorder %s19, 3
    %p152 = por %p150, %p151
    %p153 = scmp.ne.s32.totalorder %s145, %s148
    %p154 = scmp.eq.s32.totalorder %s19, 0
    %p155 = por %p153, %p154
    %p156 = scmp.ne.s32.totalorder %s145, %s148
    %p157 = scmp.eq.s32.totalorder %s24, 3
    %p158 = por %p156, %p157
    %p159 = scmp.ne.s32.totalorder %s148, %s149
    %p160 = scmp.eq.s32.totalorder %s24, 0
    %p161 = por %p159, %p160
    %p162 = scmp.ne.s32.totalorder %s148, %s149
    %p163 = scmp.eq.s32.totalorder %s25, 3
    %p164 = por %p162, %p163
    %p166 = scmp.ne.s32.totalorder %s149, %s165
    %p167 = scmp.eq.s32.totalorder %s25, 0
    %p168 = por %p166, %p167
    %s169 = ssub.s32 %s27, %s34
    %p170 = scmp.eq.s32.totalorder %s169, 0
    %s172 = sadd.s32 %s171, 1
    %s173 = scalar_select %p170, %s171, %s172
    %p176 = pneg %p170
    %p177 = scmp.eq.s32.totalorder %s19, 3
    %p178 = por %p176, %p177
    %p179 = scmp.ne.s32.totalorder %s171, %s174
    %p180 = scmp.eq.s32.totalorder %s19, 0
    %p181 = por %p179, %p180
    %p182 = scmp.ne.s32.totalorder %s171, %s174
    %p183 = scmp.eq.s32.totalorder %s24, 3
    %p184 = por %p182, %p183
    %p185 = scmp.ne.s32.totalorder %s174, %s175
    %p186 = scmp.eq.s32.totalorder %s24, 0
    %p187 = por %p185, %p186
    %p188 = scmp.ne.s32.totalorder %s174, %s175
    %p189 = scmp.eq.s32.totalorder %s25, 3
    %p190 = por %p188, %p189
    %p192 = scmp.ne.s32.totalorder %s175, %s191
    %p193 = scmp.eq.s32.totalorder %s25, 0
    %p194 = por %p192, %p193
    %s195 = ssub.s32 %s27, %s34
    %p196 = scmp.eq.s32.totalorder %s195, 0
    %s198 = sadd.s32 %s197, 1
    %s199 = scalar_select %p196, %s197, %s198
    %p202 = pneg %p196
    %p203 = scmp.eq.s32.totalorder %s19, 3
    %p204 = por %p202, %p203
    %p205 = scmp.ne.s32.totalorder %s197, %s200
    %p206 = scmp.eq.s32.totalorder %s19, 0
    %p207 = por %p205, %p206
    %p208 = scmp.ne.s32.totalorder %s197, %s200
    %p209 = scmp.eq.s32.totalorder %s24, 3
    %p210 = por %p208, %p209
    %p211 = scmp.ne.s32.totalorder %s200, %s201
    %p212 = scmp.eq.s32.totalorder %s24, 0
    %p213 = por %p211, %p212
    %p214 = scmp.ne.s32.totalorder %s200, %s201
    %p215 = scmp.eq.s32.totalorder %s25, 3
    %p216 = por %p214, %p215
    %p218 = scmp.ne.s32.totalorder %s201, %s217
    %p219 = scmp.eq.s32.totalorder %s25, 0
    %p220 = por %p218, %p219
    %s221 = ssub.s32 %s27, %s34
    %p222 = scmp.eq.s32.totalorder %s221, 0
    %s224 = sadd.s32 %s223, 1
    %s225 = scalar_select %p222, %s223, %s224
    %p228 = pneg %p222
    %p229 = scmp.eq.s32.totalorder %s19, 3
    %p230 = por %p228, %p229
    %p231 = scmp.ne.s32.totalorder %s223, %s226
    %p232 = scmp.eq.s32.totalorder %s19, 0
    %p233 = por %p231, %p232
    %p234 = scmp.ne.s32.totalorder %s223, %s226
    %p235 = scmp.eq.s32.totalorder %s24, 3
    %p236 = por %p234, %p235
    %p237 = scmp.ne.s32.totalorder %s226, %s227
    %p238 = scmp.eq.s32.totalorder %s24, 0
    %p239 = por %p237, %p238
    %p240 = scmp.ne.s32.totalorder %s226, %s227
    %p241 = scmp.eq.s32.totalorder %s25, 3
    %p242 = por %p240, %p241
    %p244 = scmp.ne.s32.totalorder %s227, %s243
    %p245 = scmp.eq.s32.totalorder %s25, 0
    %p246 = por %p244, %p245
    %s247 = ssub.s32 %s27, %s34
    %p248 = scmp.eq.s32.totalorder %s247, 0
    %s250 = sadd.s32 %s249, 1
    %s251 = scalar_select %p248, %s249, %s250
    %p254 = pneg %p248
    %p255 = scmp.eq.s32.totalorder %s19, 3
    %p256 = por %p254, %p255
    %p257 = scmp.ne.s32.totalorder %s249, %s252
    %p258 = scmp.eq.s32.totalorder %s19, 0
    %p259 = por %p257, %p258
    %p260 = scmp.ne.s32.totalorder %s249, %s252
    %p261 = scmp.eq.s32.totalorder %s24, 3
    %p262 = por %p260, %p261
    %p263 = scmp.ne.s32.totalorder %s252, %s253
    %p264 = scmp.eq.s32.totalorder %s24, 0
    %p265 = por %p263, %p264
    %p266 = scmp.ne.s32.totalorder %s252, %s253
    %p267 = scmp.eq.s32.totalorder %s25, 3
    %p268 = por %p266, %p267
    %p270 = scmp.ne.s32.totalorder %s253, %s269
    %p271 = scmp.eq.s32.totalorder %s25, 0
    %p272 = por %p270, %p271
    %s273 = ssub.s32 %s27, %s34
    %p274 = scmp.eq.s32.totalorder %s273, 0
    %s276 = sadd.s32 %s275, 1
    %s277 = scalar_select %p274, %s275, %s276
    %p280 = pneg %p274
    %p281 = scmp.eq.s32.totalorder %s19, 3
    %p282 = por %p280, %p281
    %p283 = scmp.ne.s32.totalorder %s275, %s278
    %p284 = scmp.eq.s32.totalorder %s19, 0
    %p285 = por %p283, %p284
    %p286 = scmp.ne.s32.totalorder %s275, %s278
    %p287 = scmp.eq.s32.totalorder %s24, 3
    %p288 = por %p286, %p287
    %p289 = scmp.ne.s32.totalorder %s278, %s279
    %p290 = scmp.eq.s32.totalorder %s24, 0
    %p291 = por %p289, %p290
    %p292 = scmp.ne.s32.totalorder %s278, %s279
    %p293 = scmp.eq.s32.totalorder %s25, 3
    %p294 = por %p292, %p293
    %p296 = scmp.ne.s32.totalorder %s279, %s295
    %p297 = scmp.eq.s32.totalorder %s25, 0
    %p298 = por %p296, %p297
    %s299 = ssub.s32 %s27, %s34
    %p300 = scmp.eq.s32.totalorder %s299, 0
    %s302 = sadd.s32 %s301, 1
    %s303 = scalar_select %p300, %s301, %s302
    %p306 = pneg %p300
    %p307 = scmp.eq.s32.totalorder %s19, 3
    %p308 = por %p306, %p307
    %p309 = scmp.ne.s32.totalorder %s301, %s304
    %p310 = scmp.eq.s32.totalorder %s19, 0
    %p311 = por %p309, %p310
    %p312 = scmp.ne.s32.totalorder %s301, %s304
    %p313 = scmp.eq.s32.totalorder %s24, 3
    %p314 = por %p312, %p313
    %p315 = scmp.ne.s32.totalorder %s304, %s305
    %p316 = scmp.eq.s32.totalorder %s24, 0
    %p317 = por %p315, %p316
    %p318 = scmp.ne.s32.totalorder %s304, %s305
    %p319 = scmp.eq.s32.totalorder %s25, 3
    %p320 = por %p318, %p319
    %p322 = scmp.ne.s32.totalorder %s305, %s321
    %p323 = scmp.eq.s32.totalorder %s25, 0
    %p324 = por %p322, %p323
    %s325 = ssub.s32 %s27, %s34
    %p326 = scmp.eq.s32.totalorder %s325, 0
    %s328 = sadd.s32 %s327, 1
    %s329 = scalar_select %p326, %s327, %s328
    %p332 = pneg %p326
    %p333 = scmp.eq.s32.totalorder %s19, 3
    %p334 = por %p332, %p333
    %p335 = scmp.ne.s32.totalorder %s327, %s330
    %p336 = scmp.eq.s32.totalorder %s19, 0
    %p337 = por %p335, %p336
    %p338 = scmp.ne.s32.totalorder %s327, %s330
    %p339 = scmp.eq.s32.totalorder %s24, 3
    %p340 = por %p338, %p339
    %p341 = scmp.ne.s32.totalorder %s330, %s331
    %p342 = scmp.eq.s32.totalorder %s24, 0
    %p343 = por %p341, %p342
    %p344 = scmp.ne.s32.totalorder %s330, %s331
    %p345 = scmp.eq.s32.totalorder %s25, 3
    %p346 = por %p344, %p345
    %p348 = scmp.ne.s32.totalorder %s331, %s347
    %p349 = scmp.eq.s32.totalorder %s25, 0
    %p350 = por %p348, %p349
    %s351 = ssub.s32 %s27, %s34
    %p352 = scmp.eq.s32.totalorder %s351, 0
    %s354 = sadd.s32 %s353, 1
    %s355 = scalar_select %p352, %s353, %s354
    %p358 = pneg %p352
    %p359 = scmp.eq.s32.totalorder %s19, 3
    %p360 = por %p358, %p359
    %p361 = scmp.ne.s32.totalorder %s353, %s356
    %p362 = scmp.eq.s32.totalorder %s19, 0
    %p363 = por %p361, %p362
    %p364 = scmp.ne.s32.totalorder %s353, %s356
    %p365 = scmp.eq.s32.totalorder %s24, 3
    %p366 = por %p364, %p365
    %p367 = scmp.ne.s32.totalorder %s356, %s357
    %p368 = scmp.eq.s32.totalorder %s24, 0
    %p369 = por %p367, %p368
    %p370 = scmp.ne.s32.totalorder %s356, %s357
    %p371 = scmp.eq.s32.totalorder %s25, 3
    %p372 = por %p370, %p371
    %p374 = scmp.ne.s32.totalorder %s357, %s373
    %p375 = scmp.eq.s32.totalorder %s25, 0
    %p376 = por %p374, %p375
    %s377 = ssub.s32 %s26, %s38
    %p378 = scmp.eq.s32.totalorder %s377, 0
    %s380 = sadd.s32 %s379, 1
    %s381 = scalar_select %p378, %s379, %s380
    %p384 = pneg %p378
    %p385 = scmp.eq.s32.totalorder %s19, 3
    %p386 = por %p384, %p385
    %p387 = scmp.ne.s32.totalorder %s379, %s382
    %p388 = scmp.eq.s32.totalorder %s19, 0
    %p389 = por %p387, %p388
    %p390 = scmp.ne.s32.totalorder %s379, %s382
    %p391 = scmp.eq.s32.totalorder %s24, 3
    %p392 = por %p390, %p391
    %p393 = scmp.ne.s32.totalorder %s382, %s383
    %p394 = scmp.eq.s32.totalorder %s24, 0
    %p395 = por %p393, %p394
    %p396 = scmp.ne.s32.totalorder %s382, %s383
    %p397 = scmp.eq.s32.totalorder %s25, 3
    %p398 = por %p396, %p397
    %p400 = scmp.ne.s32.totalorder %s383, %s399
    %p401 = scmp.eq.s32.totalorder %s25, 0
    %p402 = por %p400, %p401
    %p403 = scmp.le.s32.totalorder 1, %s19
    %p404 = scmp.lt.s32.totalorder %s19, 5
    %p405 = pnand %p403, %p404
    %p406 = pneg %p405
    // Predicated region
    $region9: #{vit_model_forward.4} parent=5 // pred_check
      _
    $region10: #{vit_model_forward.4} parent=5 // pred_check_branch
      %408 = sbr.rel (%p405) target = $region12
    $region11: #{vit_model_forward.4} parent=5 // pred_region
      %s409 = ssub.s32 %s19, 1
    $region12: #{vit_model_forward.4} parent=5 // pred_fallthru
      _
    %p410 = scmp.lt.s32.totalorder %s19, 4
    // Predicated region
    $region13: #{vit_model_forward.4} parent=5 // pred_check
      %p411 = pneg %p410
    $region14: #{vit_model_forward.4} parent=5 // pred_check_branch
      %413 = sbr.rel (%p411) target = $region16
    $region15: #{vit_model_forward.4} parent=5 // pred_region
      // Predicated region
      $region17: #{vit_model_forward.4} parent=15 // pred_check
        %p414 = pneg %p51
      $region18: #{vit_model_forward.4} parent=15 // pred_check_branch
        %416 = sbr.rel (%p414) target = $region20
      $region19: #{vit_model_forward.4} parent=15 // pred_region
        %p417 = scmp.lt.s32.totalorder %s26, 1
        %s418 = scalar_select %p417, %s26, 1
        %s419 = smul.addr %s418, 3
        %s420 = smul.addr %s419, 8
        %s421 = scalar_lea.vmem %s0, %s420
      $region20: #{vit_model_forward.4} parent=15 // pred_fallthru
        _
      // Predicated region
      $region21: #{vit_model_forward.4} parent=15 // pred_check
        %p422 = pneg %p77
      $region22: #{vit_model_forward.4} parent=15 // pred_check_branch
        %424 = sbr.rel (%p422) target = $region24
      $region23: #{vit_model_forward.4} parent=15 // pred_region
        %p425 = scmp.lt.s32.totalorder %s27, 1
        %s426 = scalar_select %p425, %s27, 1
        %s427 = scalar_lea.vmem %s1, %s426
      $region24: #{vit_model_forward.4} parent=15 // pred_fallthru
        _
      // Predicated region
      $region25: #{vit_model_forward.4} parent=15 // pred_check
        %p428 = pneg %p103
      $region26: #{vit_model_forward.4} parent=15 // pred_check_branch
        %430 = sbr.rel (%p428) target = $region28
      $region27: #{vit_model_forward.4} parent=15 // pred_region
        %p431 = scmp.lt.s32.totalorder %s27, 1
        %s432 = scalar_select %p431, %s27, 1
        %s433 = scalar_lea.vmem %s2, %s432
      $region28: #{vit_model_forward.4} parent=15 // pred_fallthru
        _
      // Predicated region
      $region29: #{vit_model_forward.4} parent=15 // pred_check
        %p434 = pneg %p129
      $region30: #{vit_model_forward.4} parent=15 // pred_check_branch
        %436 = sbr.rel (%p434) target = $region32
      $region31: #{vit_model_forward.4} parent=15 // pred_region
        %p437 = scmp.lt.s32.totalorder %s27, 1
        %s438 = scalar_select %p437, %s27, 1
        %s439 = smul.addr %s438, 4
        %s440 = smul.addr %s439, 4
        %s441 = scalar_lea.vmem %s3, %s440
      $region32: #{vit_model_forward.4} parent=15 // pred_fallthru
        _
      // Predicated region
      $region33: #{vit_model_forward.4} parent=15 // pred_check
        %p442 = pneg %p155
      $region34: #{vit_model_forward.4} parent=15 // pred_check_branch
        %444 = sbr.rel (%p442) target = $region36
      $region35: #{vit_model_forward.4} parent=15 // pred_region
        %p445 = scmp.lt.s32.totalorder %s27, 1
        %s446 = scalar_select %p445, %s27, 1
        %s447 = scalar_lea.vmem %s4, %s446
      $region36: #{vit_model_forward.4} parent=15 // pred_fallthru
        _
      // Predicated region
      $region37: #{vit_model_forward.4} parent=15 // pred_check
        %p448 = pneg %p181
      $region38: #{vit_model_forward.4} parent=15 // pred_check_branch
        %450 = sbr.rel (%p448) target = $region40
      $region39: #{vit_model_forward.4} parent=15 // pred_region
        %p451 = scmp.lt.s32.totalorder %s27, 1
        %s452 = scalar_select %p451, %s27, 1
        %s453 = smul.addr %s452, 4
        %s454 = smul.addr %s453, 4
        %s455 = scalar_lea.vmem %s5, %s454
      $region40: #{vit_model_forward.4} parent=15 // pred_fallthru
        _
      // Predicated region
      $region41: #{vit_model_forward.4} parent=15 // pred_check
        %p456 = pneg %p207
      $region42: #{vit_model_forward.4} parent=15 // pred_check_branch
        %458 = sbr.rel (%p456) target = $region44
      $region43: #{vit_model_forward.4} parent=15 // pred_region
        %p459 = scmp.lt.s32.totalorder %s27, 1
        %s460 = scalar_select %p459, %s27, 1
        %s461 = scalar_lea.vmem %s6, %s460
      $region44: #{vit_model_forward.4} parent=15 // pred_fallthru
        _
      // Predicated region
      $region45: #{vit_model_forward.4} parent=15 // pred_check
        %p462 = pneg %p233
      $region46: #{vit_model_forward.4} parent=15 // pred_check_branch
        %464 = sbr.rel (%p462) target = $region48
      $region47: #{vit_model_forward.4} parent=15 // pred_region
        %p465 = scmp.lt.s32.totalorder %s27, 1
        %s466 = scalar_select %p465, %s27, 1
        %s467 = scalar_lea.vmem %s7, %s466
      $region48: #{vit_model_forward.4} parent=15 // pred_fallthru
        _
      // Predicated region
      $region49: #{vit_model_forward.4} parent=15 // pred_check
        %p468 = pneg %p259
      $region50: #{vit_model_forward.4} parent=15 // pred_check_branch
        %470 = sbr.rel (%p468) target = $region52
      $region51: #{vit_model_forward.4} parent=15 // pred_region
        %p471 = scmp.lt.s32.totalorder %s27, 1
        %s472 = scalar_select %p471, %s27, 1
        %s473 = scalar_lea.vmem %s8, %s472
      $region52: #{vit_model_forward.4} parent=15 // pred_fallthru
        _
      // Predicated region
      $region53: #{vit_model_forward.4} parent=15 // pred_check
        %p474 = pneg %p285
      $region54: #{vit_model_forward.4} parent=15 // pred_check_branch
        %476 = sbr.rel (%p474) target = $region56
      $region55: #{vit_model_forward.4} parent=15 // pred_region
        %p477 = scmp.lt.s32.totalorder %s27, 1
        %s478 = scalar_select %p477, %s27, 1
        %s479 = smul.addr %s478, 4
        %s480 = smul.addr %s479, 4
        %s481 = scalar_lea.vmem %s9, %s480
      $region56: #{vit_model_forward.4} parent=15 // pred_fallthru
        _
      // Predicated region
      $region57: #{vit_model_forward.4} parent=15 // pred_check
        %p482 = pneg %p311
      $region58: #{vit_model_forward.4} parent=15 // pred_check_branch
        %484 = sbr.rel (%p482) target = $region60
      $region59: #{vit_model_forward.4} parent=15 // pred_region
        %p485 = scmp.lt.s32.totalorder %s27, 1
        %s486 = scalar_select %p485, %s27, 1
        %s487 = scalar_lea.vmem %s10, %s486
      $region60: #{vit_model_forward.4} parent=15 // pred_fallthru
        _
      // Predicated region
      $region61: #{vit_model_forward.4} parent=15 // pred_check
        %p488 = pneg %p337
      $region62: #{vit_model_forward.4} parent=15 // pred_check_branch
        %490 = sbr.rel (%p488) target = $region64
      $region63: #{vit_model_forward.4} parent=15 // pred_region
        %p491 = scmp.lt.s32.totalorder %s27, 1
        %s492 = scalar_select %p491, %s27, 1
        %s493 = smul.addr %s492, 8
        %s494 = smul.addr %s493, 4
        %s495 = scalar_lea.vmem %s11, %s494
      $region64: #{vit_model_forward.4} parent=15 // pred_fallthru
        _
      // Predicated region
      $region65: #{vit_model_forward.4} parent=15 // pred_check
        %p496 = pneg %p363
      $region66: #{vit_model_forward.4} parent=15 // pred_check_branch
        %498 = sbr.rel (%p496) target = $region68
      $region67: #{vit_model_forward.4} parent=15 // pred_region
        %p499 = scmp.lt.s32.totalorder %s27, 1
        %s500 = scalar_select %p499, %s27, 1
        %s501 = scalar_lea.vmem %s12, %s500
      $region68: #{vit_model_forward.4} parent=15 // pred_fallthru
        _
    $region16: #{vit_model_forward.4} parent=5 // pred_fallthru
      _
    %p502 = scmp.le.s32.totalorder 1, %s19
    %p503 = scmp.lt.s32.totalorder %s19, 5
    %p504 = pnand %p502, %p503
    %p505 = pneg %p504
    // Predicated region
    $region69: #{vit_model_forward.4} parent=5 // pred_check
      _
    $region70: #{vit_model_forward.4} parent=5 // pred_check_branch
      %507 = sbr.rel (%p504) target = $region72
    $region71: #{vit_model_forward.4} parent=5 // pred_region
      %s508 = ssub.s32 %s19, 1
      %p509 = scmp.lt.s32.totalorder %s28, 1
      %s510 = scalar_select %p509, %s28, 1
      %s511 = smul.addr %s510, 3
      %s512 = smul.addr %s511, 8
      %s513 = scalar_lea.vmem %s0, %s512
      %p514 = pneg %p57
      %p515 = pneg %p54
      %p516 = scmp.lt.s32.totalorder %s29, 1
      %s517 = scalar_select %p516, %s29, 1
      %s518 = scalar_lea.vmem %s1, %s517
      %p519 = pneg %p83
      %p520 = pneg %p80
      %p521 = scmp.lt.s32.totalorder %s29, 1
      %s522 = scalar_select %p521, %s29, 1
      %s523 = scalar_lea.vmem %s2, %s522
      %p524 = pneg %p109
      %p525 = pneg %p106
      %p526 = scmp.lt.s32.totalorder %s29, 1
      %s527 = scalar_select %p526, %s29, 1
      %s528 = smul.addr %s527, 4
      %s529 = smul.addr %s528, 4
      %s530 = scalar_lea.vmem %s3, %s529
      %p531 = pneg %p135
      %p532 = pneg %p132
      %p533 = scmp.lt.s32.totalorder %s29, 1
      %s534 = scalar_select %p533, %s29, 1
      %s535 = scalar_lea.vmem %s4, %s534
      %p536 = pneg %p161
      %p537 = pneg %p158
      %p538 = scmp.lt.s32.totalorder %s29, 1
      %s539 = scalar_select %p538, %s29, 1
      %s540 = smul.addr %s539, 4
      %s541 = smul.addr %s540, 4
      %s542 = scalar_lea.vmem %s5, %s541
      %p543 = pneg %p187
      %p544 = pneg %p184
      %p545 = scmp.lt.s32.totalorder %s29, 1
      %s546 = scalar_select %p545, %s29, 1
      %s547 = scalar_lea.vmem %s6, %s546
      %p548 = pneg %p213
      %p549 = pneg %p210
      %p550 = scmp.lt.s32.totalorder %s29, 1
      %s551 = scalar_select %p550, %s29, 1
      %s552 = scalar_lea.vmem %s7, %s551
      %p553 = pneg %p239
      %p554 = pneg %p236
      %p555 = scmp.lt.s32.totalorder %s29, 1
      %s556 = scalar_select %p555, %s29, 1
      %s557 = scalar_lea.vmem %s8, %s556
      %p558 = pneg %p265
      %p559 = pneg %p262
      %p560 = scmp.lt.s32.totalorder %s29, 1
      %s561 = scalar_select %p560, %s29, 1
      %s562 = smul.addr %s561, 4
      %s563 = smul.addr %s562, 4
      %s564 = scalar_lea.vmem %s9, %s563
      %p565 = pneg %p291
      %p566 = pneg %p288
      %p567 = scmp.lt.s32.totalorder %s29, 1
      %s568 = scalar_select %p567, %s29, 1
      %s569 = scalar_lea.vmem %s10, %s568
      %p570 = pneg %p317
      %p571 = pneg %p314
      %p572 = scmp.lt.s32.totalorder %s29, 1
      %s573 = scalar_select %p572, %s29, 1
      %s574 = smul.addr %s573, 8
      %s575 = smul.addr %s574, 4
      %s576 = scalar_lea.vmem %s11, %s575
      %p577 = pneg %p343
      %p578 = pneg %p340
      %p579 = scmp.lt.s32.totalorder %s29, 1
      %s580 = scalar_select %p579, %s29, 1
      %s581 = scalar_lea.vmem %s12, %s580
      %p582 = pneg %p369
      %p583 = pneg %p366
      %p584 = pneg %p395
      %p585 = pneg %p392
      %p586 = scmp.lt.s32.totalorder %s28, 1
      %s587 = scalar_select %p586, %s28, 1
      %s588 = smul.addr %s587, 3
      %s589 = smul.addr %s588, 8
      %s590 = scalar_lea.vmem %s13, %s589
      %p591 = scmp.lt.s32.totalorder %s28, 1
      %s592 = scalar_select %p591, %s28, 1
      %s593 = smul.addr %s592, 3
      %s594 = smul.addr %s593, 8
      %s595 = scalar_lea.vmem %s0, %s594
      %p596 = scmp.lt.s32.totalorder %s29, 1
      %s597 = scalar_select %p596, %s29, 1
      %s598 = scalar_lea.vmem %s1, %s597
      %p599 = scmp.lt.s32.totalorder %s29, 1
      %s600 = scalar_select %p599, %s29, 1
      %s601 = scalar_lea.vmem %s2, %s600
      %p602 = scmp.lt.s32.totalorder %s29, 1
      %s603 = scalar_select %p602, %s29, 1
      %s604 = smul.addr %s603, 4
      %s605 = smul.addr %s604, 4
      %s606 = scalar_lea.vmem %s3, %s605
      %p607 = scmp.lt.s32.totalorder %s29, 1
      %s608 = scalar_select %p607, %s29, 1
      %s609 = scalar_lea.vmem %s4, %s608
      %p610 = scmp.lt.s32.totalorder %s29, 1
      %s611 = scalar_select %p610, %s29, 1
      %s612 = smul.addr %s611, 4
      %s613 = smul.addr %s612, 4
      %s614 = scalar_lea.vmem %s5, %s613
      %p615 = scmp.lt.s32.totalorder %s29, 1
      %s616 = scalar_select %p615, %s29, 1
      %s617 = scalar_lea.vmem %s6, %s616
      %p618 = scmp.lt.s32.totalorder %s29, 1
      %s619 = scalar_select %p618, %s29, 1
      %s620 = scalar_lea.vmem %s7, %s619
      %p621 = scmp.lt.s32.totalorder %s29, 1
      %s622 = scalar_select %p621, %s29, 1
      %s623 = scalar_lea.vmem %s8, %s622
      %p624 = scmp.lt.s32.totalorder %s29, 1
      %s625 = scalar_select %p624, %s29, 1
      %s626 = smul.addr %s625, 4
      %s627 = smul.addr %s626, 4
      %s628 = scalar_lea.vmem %s9, %s627
      %p629 = scmp.lt.s32.totalorder %s29, 1
      %s630 = scalar_select %p629, %s29, 1
      %s631 = scalar_lea.vmem %s10, %s630
      %p632 = scmp.lt.s32.totalorder %s29, 1
      %s633 = scalar_select %p632, %s29, 1
      %s634 = smul.addr %s633, 8
      %s635 = smul.addr %s634, 4
      %s636 = scalar_lea.vmem %s11, %s635
      %p637 = scmp.lt.s32.totalorder %s29, 1
      %s638 = scalar_select %p637, %s29, 1
      %s639 = scalar_lea.vmem %s12, %s638
      %p640 = scmp.lt.s32.totalorder %s28, 1
      %s641 = scalar_select %p640, %s28, 1
      %s642 = smul.addr %s641, 3
      %s643 = smul.addr %s642, 8
      %s644 = scalar_lea.vmem %s13, %s643
      %p646 = scmp.eq.s32.totalorder %s29, 0
      // Predicated region
      $region73: #{vit_model_forward.4} parent=71 // pred_check
        %p647 = pneg %p646
      $region74: #{vit_model_forward.4} parent=71 // pred_check_branch
        %649 = sbr.rel (%p647) target = $region76
      $region75: #{vit_model_forward.4} parent=71 // pred_region
        %v650 = vld [vmem:[%s595] sm:$0xff]
        %v651 = vld [vmem:[%s595 + $0x8] sm:$0xff]
        %v652 = vld [vmem:[%s595 + $0x10] sm:$0x1]
        %vm653 = vcmask 261120
        %654 = vst.msk [vmem:[#allocation2] sm:$0xff] %vm653, %v650
        %655 = vst.msk [vmem:[#allocation2 + $0x8] sm:$0xff] %vm653, %v651
        %vm656 = vcmask 253952
        %657 = vst.msk [vmem:[#allocation2 + $0x10] sm:$0x1] %vm656, %v652
      $region76: #{vit_model_forward.4} parent=71 // pred_fallthru
        _
      %v658 = vld [vmem:[#allocation2] sm:$0xff]
      %v659 = vld [vmem:[#allocation2 + $0x8] sm:$0xff]
      %v660 = vld [vmem:[#allocation2 + $0x10] sm:$0x1]
      %v661 = vld [vmem:[%s598] sm:$0x1]
      %v662 = vld [vmem:[%s601] sm:$0x1]
      %vm663 = vcmask 261120
      %v664 = vsel %vm663, %v658, 0.0
      %665 = vadd.xlane.f32.xlu0 %v664
      %v666 = vpop.xlane.xlu0 %665
      %v667 = vsel %vm663, %v659, 0.0
      %668 = vadd.xlane.f32.xlu0 %v667
      %v669 = vpop.xlane.xlu0 %668
      %vm670 = vcmask 253952
      %v671 = vsel %vm670, %v660, 0.0
      %672 = vadd.xlane.f32.xlu0 %v671
      %v673 = vpop.xlane.xlu0 %672
      %v674 = vrcp.pop 32.0
      %v675 = vmul.f32 %v666, %v674
      %v676 = vmul.f32 %v669, %v674
      %v677 = vmul.f32 %v673, %v674
      %v678 = vsub.f32 %v658, %v675
      %v679 = vsub.f32 %v659, %v676
      %v680 = vsub.f32 %v660, %v677
      %v681 = vmul.f32 %v678, %v678
      %v682 = vmul.f32 %v679, %v679
      %v683 = vmul.f32 %v680, %v680
      %v684 = vsel %vm663, %v681, 0.0
      %685 = vadd.xlane.f32.xlu0 %v684
      %v686 = vpop.xlane.xlu0 %685
      %v687 = vsel %vm663, %v682, 0.0
      %688 = vadd.xlane.f32.xlu0 %v687
      %v689 = vpop.xlane.xlu0 %688
      %v690 = vsel %vm670, %v683, 0.0
      %691 = vadd.xlane.f32.xlu0 %v690
      %v692 = vpop.xlane.xlu0 %691
      %v693 = vmul.f32 %v686, %v674
      %v694 = vmul.f32 %v689, %v674
      %v695 = vmul.f32 %v692, %v674
      %v696 = vadd.f32 %v693, 1e-05
      %v697 = vadd.f32 %v694, 1e-05
      %v698 = vadd.f32 %v695, 1e-05
      %v699 = vrsqrt.pop %v696
      %v700 = vrsqrt.pop %v697
      %v701 = vrsqrt.pop %v698
      %v702 = vmul.f32 %v678, %v699
      %v703 = vmul.f32 %v679, %v700
      %v704 = vmul.f32 %v680, %v701
      %v706 = vlaneseq
      %v707 = vshrl.u32 %v706, 7
      %v708 = vsub.s32 0, %v707
      %v709 = vrot.slane %v661, %v708
      %v711 = vmul.f32 %v702, %v709
      %v712 = vmul.f32 %v703, %v709
      %v713 = vmul.f32 %v704, %v709
      %v715 = vlaneseq
      %v716 = vshrl.u32 %v715, 7
      %v717 = vsub.s32 0, %v716
      %v718 = vrot.slane %v662, %v717
      %v720 = vadd.f32 %v711, %v718
      %v721 = vadd.f32 %v712, %v718
      %v722 = vadd.f32 %v713, %v718
      %v723 = vpack.c.bf16 %v721, %v720
      %v724 = vpack.c.bf16 %v722, %v722
      %v725 = vld [vmem:[%s606] sm:$0xf]
      %v726 = vld [vmem:[%s606 + $0x4] sm:$0xf]
      %v727 = vld [vmem:[%s606 + $0x8] sm:$0xf]
      %v728 = vld [vmem:[%s606 + $0xc] sm:$0xf]
      %v729 = vld [vmem:[%s609] sm:$0x1]
      %v731 = vlaneseq
      %v732 = vshrl.u32 %v731, 7
      %v733 = vsub.s32 0, %v732
      %v734 = vrot.slane %v729, %v733
      %v740 = vunpack.c.l.b16 %v725
      %v741 = vunpack.c.l.b16 %v726
      %v742 = vunpack.c.l.b16 %v727
      %v743 = vunpack.c.l.b16 %v728
      %v744 = vpack.c.b16 %v741, %v740
      %v745 = vpack.c.b16 %v743, %v742
      %v749 = vsel %vm663, %v723, 0
      %v752 = vsel %vm663, %v724, 0
      %754 = vmatprep.subr.bf16.mxu0 0
      %755 = vmatpush1.bf16.msra.mxu0 0
      %756 = vmatprep.subr.bf16.mxu0 0
      %757 = vmatpush1.bf16.msra.mxu0 0
      %758 = vmatprep.subr.bf16.mxu0 0
      %759 = vmatpush1.bf16.msra.mxu0 0
      %760 = vmatprep.subr.bf16.mxu0 0
      %761 = vmatpush1.bf16.msra.mxu0 0
      %762 = vmatprep.subr.bf16.mxu0 0
      %763 = vmatpush1.bf16.msra.mxu0 0
      %764 = vmatprep.subr.bf16.mxu0 0
      %765 = vmatpush1.bf16.msra.mxu0 0
      %766 = vmatprep.subr.bf16.mxu0 0
      %767 = vmatpush1.bf16.msra.mxu0 %v745
      %768 = vmatprep.subr.bf16.mxu0 0
      %769 = vmatpush1.bf16.msra.mxu0 %v744
      %770 = vmatprep.subr.bf16.mxu0 0
      %771 = vmatpush2.bf16.msra.mxu0 0
      %772 = vmatprep.subr.bf16.mxu0 0
      %773 = vmatpush2.bf16.msra.mxu0 0
      %774 = vmatprep.subr.bf16.mxu0 0
      %775 = vmatpush2.bf16.msra.mxu0 0
      %776 = vmatprep.subr.bf16.mxu0 0
      %777 = vmatpush2.bf16.msra.mxu0 0
      %778 = vmatprep.subr.bf16.mxu0 0
      %779 = vmatpush2.bf16.msra.mxu0 0
      %780 = vmatprep.subr.bf16.mxu0 0
      %781 = vmatpush2.bf16.msra.mxu0 0
      %782 = vmatprep.subr.bf16.mxu0 0
      %783 = vmatpush2.bf16.msra.mxu0 0
      %784 = vmatprep.subr.bf16.mxu0 0
      %785 = vmatpush2.bf16.msra.mxu0 0
      %786 = vmatprep.mubr.bf16.mxu0 0
      %787 = vmatmul.mubr.bf16.gmra.mxu0 %v749
      %v788 = vpop.f32.mrf.mxu0
      %v789 = vadd.f32 %v734, %v788
      %v790 = vpop.f32.mrf.mxu0
      %v791 = vpop.f32.mrf.mxu0
      %v792 = vadd.f32 %v734, %v791
      %v793 = vpop.f32.mrf.mxu0
      %794 = vmatprep.mubr.bf16.mxu0 0
      %795 = vmatmul.mubr.bf16.gmra.mxu0 %v752
      %v796 = vpop.f32.mrf.mxu0
      %v797 = vadd.f32 %v734, %v796
      %v798 = vpop.f32.mrf.mxu0
      %v799 = vpop.f32.mrf.mxu0
      %v800 = vpop.f32.mrf.mxu0
      %801 = vdwg.mxu0
      %v802 = vmul.f32 %v789, 0.35355338
      %v803 = vmul.f32 %v792, 0.35355338
      %v804 = vmul.f32 %v797, 0.35355338
      %v805 = vpack.c.bf16 %v803, %v802
      %v806 = vpack.c.bf16 %v804, %v804
      %v807 = vpack.c.bf16 %v792, %v789
      %v808 = vpack.c.bf16 %v797, %v797
      %811 = vrot.lane.b32.xlu0 %v807, 96
      %v812 = vpop.permute.xlu0 %811
      %813 = vrot.lane.b32.xlu0 %v808, 96
      %v814 = vpop.permute.xlu0 %813
      %vm815 = vcmask 64512
      %v817 = vsel %vm815, %v805, 0
      %v820 = vsel %vm815, %v806, 0
      %v823 = vsel %vm815, %v812, 0
      %v826 = vsel %vm815, %v814, 0
      %828 = vmatprep.subr.bf16.mxu0 0
      %829 = vmatpush1.bf16.xpose.msra.mxu0 0
      %830 = vmatprep.subr.bf16.mxu0 0
      %831 = vmatpush1.bf16.xpose.msra.mxu0 0
      %832 = vmatprep.subr.bf16.mxu0 0
      %833 = vmatpush1.bf16.xpose.msra.mxu0 0
      %834 = vmatprep.subr.bf16.mxu0 0
      %835 = vmatpush1.bf16.xpose.msra.mxu0 0
      %836 = vmatprep.subr.bf16.mxu0 0
      %837 = vmatpush1.bf16.xpose.msra.mxu0 0
      %838 = vmatprep.subr.bf16.mxu0 0
      %839 = vmatpush1.bf16.xpose.msra.mxu0 0
      %840 = vmatprep.subr.bf16.mxu0 0
      %841 = vmatpush1.bf16.xpose.msra.mxu0 %v826
      %842 = vmatprep.subr.bf16.mxu0 0
      %843 = vmatpush1.bf16.xpose.msra.mxu0 %v823
      %844 = vmatprep.subr.bf16.mxu0 0
      %845 = vmatpush2.bf16.xpose.msra.mxu0 0
      %846 = vmatprep.subr.bf16.mxu0 0
      %847 = vmatpush2.bf16.xpose.msra.mxu0 0
      %848 = vmatprep.subr.bf16.mxu0 0
      %849 = vmatpush2.bf16.xpose.msra.mxu0 0
      %850 = vmatprep.subr.bf16.mxu0 0
      %851 = vmatpush2.bf16.xpose.msra.mxu0 0
      %852 = vmatprep.subr.bf16.mxu0 0
      %853 = vmatpush2.bf16.xpose.msra.mxu0 0
      %854 = vmatprep.subr.bf16.mxu0 0
      %855 = vmatpush2.bf16.xpose.msra.mxu0 0
      %856 = vmatprep.subr.bf16.mxu0 0
      %857 = vmatpush2.bf16.xpose.msra.mxu0 0
      %858 = vmatprep.subr.bf16.mxu0 0
      %859 = vmatpush2.bf16.xpose.msra.mxu0 0
      %860 = vmatprep.mubr.bf16.mxu0 0
      %861 = vmatmul.mubr.bf16.gmra.mxu0 %v817
      %v862 = vpop.f32.mrf.mxu0
      %v863 = vadd.f32 0.0, %v862
      %v864 = vpop.f32.mrf.mxu0
      %v865 = vpop.f32.mrf.mxu0
      %v866 = vadd.f32 0.0, %v865
      %v867 = vpop.f32.mrf.mxu0
      %868 = vmatprep.mubr.bf16.mxu0 0
      %869 = vmatmul.mubr.bf16.gmra.mxu0 %v820
      %v870 = vpop.f32.mrf.mxu0
      %v871 = vadd.f32 0.0, %v870
      %v872 = vpop.f32.mrf.mxu0
      %v873 = vpop.f32.mrf.mxu0
      %v874 = vpop.f32.mrf.mxu0
      %875 = vdwg.mxu0
      %vm876 = vcmask 138240
      %v877 = vsel %vm876, %v863, -inf
      %878 = vmax.xlane.f32.xlu0 %v877
      %v879 = vpop.xlane.xlu0 %878
      %v880 = vsel %vm876, %v866, -inf
      %881 = vmax.xlane.f32.xlu0 %v880
      %v882 = vpop.xlane.xlu0 %881
      %vm883 = vcmask 131072
      %v884 = vsel %vm883, %v871, -inf
      %885 = vmax.xlane.f32.xlu0 %v884
      %v886 = vpop.xlane.xlu0 %885
      %v887 = vsub.f32 %v863, %v879
      %v888 = vsub.f32 %v866, %v882
      %v889 = vsub.f32 %v871, %v886
      %v890 = vmul.f32 %v887, 1.442695
      %v891 = vpow.pop %v890
      %v892 = vmul.f32 %v888, 1.442695
      %v893 = vpow.pop %v892
      %v894 = vmul.f32 %v889, 1.442695
      %v895 = vpow.pop %v894
      %v896 = vsel %vm876, %v891, 0.0
      %897 = vadd.xlane.f32.xlu0 %v896
      %v898 = vpop.xlane.xlu0 %897
      %v899 = vsel %vm876, %v893, 0.0
      %900 = vadd.xlane.f32.xlu0 %v899
      %v901 = vpop.xlane.xlu0 %900
      %v902 = vsel %vm883, %v895, 0.0
      %903 = vadd.xlane.f32.xlu0 %v902
      %v904 = vpop.xlane.xlu0 %903
      %v905 = vrcp.pop %v898
      %v906 = vrcp.pop %v901
      %v907 = vrcp.pop %v904
      %v908 = vpack.c.bf16 %v893, %v891
      %v909 = vpack.c.bf16 %v895, %v895
      %910 = vrot.lane.b32.xlu0 %v807, 64
      %v911 = vpop.permute.xlu0 %910
      %912 = vrot.lane.b32.xlu0 %v808, 64
      %v913 = vpop.permute.xlu0 %912
      %v916 = vsel %vm876, %v908, 0
      %v919 = vsel %vm876, %v909, 0
      %vm921 = vcmask 1040384
      %v922 = vsel 0, 4294967295, 65535
      %v923 = vsel %vm921, %v922, 0
      %v925 = vand.u32 %v913, %v923
      %927 = vmatprep.subr.bf16.mxu0 0
      %928 = vmatpush1.bf16.msra.mxu0 0
      %929 = vmatprep.subr.bf16.mxu0 0
      %930 = vmatpush1.bf16.msra.mxu0 0
      %931 = vmatprep.subr.bf16.mxu0 0
      %932 = vmatpush1.bf16.msra.mxu0 0
      %933 = vmatprep.subr.bf16.mxu0 0
      %934 = vmatpush1.bf16.msra.mxu0 0
      %935 = vmatprep.subr.bf16.mxu0 0
      %936 = vmatpush1.bf16.msra.mxu0 0
      %937 = vmatprep.subr.bf16.mxu0 0
      %938 = vmatpush1.bf16.msra.mxu0 0
      %939 = vmatprep.subr.bf16.mxu0 0
      %940 = vmatpush1.bf16.msra.mxu0 %v925
      %941 = vmatprep.subr.bf16.mxu0 0
      %942 = vmatpush1.bf16.msra.mxu0 %v911
      %943 = vmatprep.subr.bf16.mxu0 0
      %944 = vmatpush2.bf16.msra.mxu0 0
      %945 = vmatprep.subr.bf16.mxu0 0
      %946 = vmatpush2.bf16.msra.mxu0 0
      %947 = vmatprep.subr.bf16.mxu0 0
      %948 = vmatpush2.bf16.msra.mxu0 0
      %949 = vmatprep.subr.bf16.mxu0 0
      %950 = vmatpush2.bf16.msra.mxu0 0
      %951 = vmatprep.subr.bf16.mxu0 0
      %952 = vmatpush2.bf16.msra.mxu0 0
      %953 = vmatprep.subr.bf16.mxu0 0
      %954 = vmatpush2.bf16.msra.mxu0 0
      %955 = vmatprep.subr.bf16.mxu0 0
      %956 = vmatpush2.bf16.msra.mxu0 0
      %957 = vmatprep.subr.bf16.mxu0 0
      %958 = vmatpush2.bf16.msra.mxu0 0
      %959 = vmatprep.mubr.bf16.mxu0 0
      %960 = vmatmul.mubr.bf16.gmra.mxu0 %v916
      %v961 = vpop.f32.mrf.mxu0
      %v962 = vadd.f32 0.0, %v961
      %v963 = vpop.f32.mrf.mxu0
      %v964 = vpop.f32.mrf.mxu0
      %v965 = vadd.f32 0.0, %v964
      %v966 = vpop.f32.mrf.mxu0
      %967 = vmatprep.mubr.bf16.mxu0 0
      %968 = vmatmul.mubr.bf16.gmra.mxu0 %v919
      %v969 = vpop.f32.mrf.mxu0
      %v970 = vadd.f32 0.0, %v969
      %v971 = vpop.f32.mrf.mxu0
      %v972 = vpop.f32.mrf.mxu0
      %v973 = vpop.f32.mrf.mxu0
      %974 = vdwg.mxu0
      %v975 = vmul.f32 %v962, %v905
      %v976 = vmul.f32 %v965, %v906
      %v977 = vmul.f32 %v970, %v907
      %980 = vrot.lane.b32.xlu0 %v805, 120
      %v981 = vpop.permute.xlu0 %980
      %982 = vrot.lane.b32.xlu0 %v806, 120
      %v983 = vpop.permute.xlu0 %982
      %984 = vrot.lane.b32.xlu0 %v807, 88
      %v985 = vpop.permute.xlu0 %984
      %986 = vrot.lane.b32.xlu0 %v808, 88
      %v987 = vpop.permute.xlu0 %986
      %v989 = vsel %vm815, %v981, 0
      %v992 = vsel %vm815, %v983, 0
      %v995 = vsel %vm815, %v985, 0
      %v998 = vsel %vm815, %v987, 0
      %1000 = vmatprep.subr.bf16.mxu0 0
      %1001 = vmatpush1.bf16.xpose.msra.mxu0 0
      %1002 = vmatprep.subr.bf16.mxu0 0
      %1003 = vmatpush1.bf16.xpose.msra.mxu0 0
      %1004 = vmatprep.subr.bf16.mxu0 0
      %1005 = vmatpush1.bf16.xpose.msra.mxu0 0
      %1006 = vmatprep.subr.bf16.mxu0 0
      %1007 = vmatpush1.bf16.xpose.msra.mxu0 0
      %1008 = vmatprep.subr.bf16.mxu0 0
      %1009 = vmatpush1.bf16.xpose.msra.mxu0 0
      %1010 = vmatprep.subr.bf16.mxu0 0
      %1011 = vmatpush1.bf16.xpose.msra.mxu0 0
      %1012 = vmatprep.subr.bf16.mxu0 0
      %1013 = vmatpush1.bf16.xpose.msra.mxu0 %v998
      %1014 = vmatprep.subr.bf16.mxu0 0
      %1015 = vmatpush1.bf16.xpose.msra.mxu0 %v995
      %1016 = vmatprep.subr.bf16.mxu0 0
      %1017 = vmatpush2.bf16.xpose.msra.mxu0 0
      %1018 = vmatprep.subr.bf16.mxu0 0
      %1019 = vmatpush2.bf16.xpose.msra.mxu0 0
      %1020 = vmatprep.subr.bf16.mxu0 0
      %1021 = vmatpush2.bf16.xpose.msra.mxu0 0
      %1022 = vmatprep.subr.bf16.mxu0 0
      %1023 = vmatpush2.bf16.xpose.msra.mxu0 0
      %1024 = vmatprep.subr.bf16.mxu0 0
      %1025 = vmatpush2.bf16.xpose.msra.mxu0 0
      %1026 = vmatprep.subr.bf16.mxu0 0
      %1027 = vmatpush2.bf16.xpose.msra.mxu0 0
      %1028 = vmatprep.subr.bf16.mxu0 0
      %1029 = vmatpush2.bf16.xpose.msra.mxu0 0
      %1030 = vmatprep.subr.bf16.mxu0 0
      %1031 = vmatpush2.bf16.xpose.msra.mxu0 0
      %1032 = vmatprep.mubr.bf16.mxu0 0
      %1033 = vmatmul.mubr.bf16.gmra.mxu0 %v989
      %v1034 = vpop.f32.mrf.mxu0
      %v1035 = vadd.f32 0.0, %v1034
      %v1036 = vpop.f32.mrf.mxu0
      %v1037 = vpop.f32.mrf.mxu0
      %v1038 = vadd.f32 0.0, %v1037
      %v1039 = vpop.f32.mrf.mxu0
      %1040 = vmatprep.mubr.bf16.mxu0 0
      %1041 = vmatmul.mubr.bf16.gmra.mxu0 %v992
      %v1042 = vpop.f32.mrf.mxu0
      %v1043 = vadd.f32 0.0, %v1042
      %v1044 = vpop.f32.mrf.mxu0
      %v1045 = vpop.f32.mrf.mxu0
      %v1046 = vpop.f32.mrf.mxu0
      %1047 = vdwg.mxu0
      %v1048 = vsel %vm876, %v1035, -inf
      %1049 = vmax.xlane.f32.xlu0 %v1048
      %v1050 = vpop.xlane.xlu0 %1049
      %v1051 = vsel %vm876, %v1038, -inf
      %1052 = vmax.xlane.f32.xlu0 %v1051
      %v1053 = vpop.xlane.xlu0 %1052
      %v1054 = vsel %vm883, %v1043, -inf
      %1055 = vmax.xlane.f32.xlu0 %v1054
      %v1056 = vpop.xlane.xlu0 %1055
      %v1057 = vsub.f32 %v1035, %v1050
      %v1058 = vsub.f32 %v1038, %v1053
      %v1059 = vsub.f32 %v1043, %v1056
      %v1060 = vmul.f32 %v1057, 1.442695
      %v1061 = vpow.pop %v1060
      %v1062 = vmul.f32 %v1058, 1.442695
      %v1063 = vpow.pop %v1062
      %v1064 = vmul.f32 %v1059, 1.442695
      %v1065 = vpow.pop %v1064
      %v1066 = vsel %vm876, %v1061, 0.0
      %1067 = vadd.xlane.f32.xlu0 %v1066
      %v1068 = vpop.xlane.xlu0 %1067
      %v1069 = vsel %vm876, %v1063, 0.0
      %1070 = vadd.xlane.f32.xlu0 %v1069
      %v1071 = vpop.xlane.xlu0 %1070
      %v1072 = vsel %vm883, %v1065, 0.0
      %1073 = vadd.xlane.f32.xlu0 %v1072
      %v1074 = vpop.xlane.xlu0 %1073
      %v1075 = vrcp.pop %v1068
      %v1076 = vrcp.pop %v1071
      %v1077 = vrcp.pop %v1074
      %v1078 = vpack.c.bf16 %v1063, %v1061
      %v1079 = vpack.c.bf16 %v1065, %v1065
      %1080 = vrot.lane.b32.xlu0 %v807, 56
      %v1081 = vpop.permute.xlu0 %1080
      %1082 = vrot.lane.b32.xlu0 %v808, 56
      %v1083 = vpop.permute.xlu0 %1082
      %v1086 = vsel %vm876, %v1078, 0
      %v1089 = vsel %vm876, %v1079, 0
      %v1092 = vand.u32 %v1083, %v923
      %1094 = vmatprep.subr.bf16.mxu0 0
      %1095 = vmatpush1.bf16.msra.mxu0 0
      %1096 = vmatprep.subr.bf16.mxu0 0
      %1097 = vmatpush1.bf16.msra.mxu0 0
      %1098 = vmatprep.subr.bf16.mxu0 0
      %1099 = vmatpush1.bf16.msra.mxu0 0
      %1100 = vmatprep.subr.bf16.mxu0 0
      %1101 = vmatpush1.bf16.msra.mxu0 0
      %1102 = vmatprep.subr.bf16.mxu0 0
      %1103 = vmatpush1.bf16.msra.mxu0 0
      %1104 = vmatprep.subr.bf16.mxu0 0
      %1105 = vmatpush1.bf16.msra.mxu0 0
      %1106 = vmatprep.subr.bf16.mxu0 0
      %1107 = vmatpush1.bf16.msra.mxu0 %v1092
      %1108 = vmatprep.subr.bf16.mxu0 0
      %1109 = vmatpush1.bf16.msra.mxu0 %v1081
      %1110 = vmatprep.subr.bf16.mxu0 0
      %1111 = vmatpush2.bf16.msra.mxu0 0
      %1112 = vmatprep.subr.bf16.mxu0 0
      %1113 = vmatpush2.bf16.msra.mxu0 0
      %1114 = vmatprep.subr.bf16.mxu0 0
      %1115 = vmatpush2.bf16.msra.mxu0 0
      %1116 = vmatprep.subr.bf16.mxu0 0
      %1117 = vmatpush2.bf16.msra.mxu0 0
      %1118 = vmatprep.subr.bf16.mxu0 0
      %1119 = vmatpush2.bf16.msra.mxu0 0
      %1120 = vmatprep.subr.bf16.mxu0 0
      %1121 = vmatpush2.bf16.msra.mxu0 0
      %1122 = vmatprep.subr.bf16.mxu0 0
      %1123 = vmatpush2.bf16.msra.mxu0 0
      %1124 = vmatprep.subr.bf16.mxu0 0
      %1125 = vmatpush2.bf16.msra.mxu0 0
      %1126 = vmatprep.mubr.bf16.mxu0 0
      %1127 = vmatmul.mubr.bf16.gmra.mxu0 %v1086
      %v1128 = vpop.f32.mrf.mxu0
      %v1129 = vadd.f32 0.0, %v1128
      %v1130 = vpop.f32.mrf.mxu0
      %v1131 = vpop.f32.mrf.mxu0
      %v1132 = vadd.f32 0.0, %v1131
      %v1133 = vpop.f32.mrf.mxu0
      %1134 = vmatprep.mubr.bf16.mxu0 0
      %1135 = vmatmul.mubr.bf16.gmra.mxu0 %v1089
      %v1136 = vpop.f32.mrf.mxu0
      %v1137 = vadd.f32 0.0, %v1136
      %v1138 = vpop.f32.mrf.mxu0
      %v1139 = vpop.f32.mrf.mxu0
      %v1140 = vpop.f32.mrf.mxu0
      %1141 = vdwg.mxu0
      %v1142 = vmul.f32 %v1129, %v1075
      %v1143 = vmul.f32 %v1132, %v1076
      %v1144 = vmul.f32 %v1137, %v1077
      %1145 = vrot.lane.b32.xlu0 %v805, 112
      %v1146 = vpop.permute.xlu0 %1145
      %1147 = vrot.lane.b32.xlu0 %v806, 112
      %v1148 = vpop.permute.xlu0 %1147
      %1149 = vrot.lane.b32.xlu0 %v807, 80
      %v1150 = vpop.permute.xlu0 %1149
      %1151 = vrot.lane.b32.xlu0 %v808, 80
      %v1152 = vpop.permute.xlu0 %1151
      %v1154 = vsel %vm815, %v1146, 0
      %v1157 = vsel %vm815, %v1148, 0
      %v1160 = vsel %vm815, %v1150, 0
      %v1163 = vsel %vm815, %v1152, 0
      %1165 = vmatprep.subr.bf16.mxu0 0
      %1166 = vmatpush1.bf16.xpose.msra.mxu0 0
      %1167 = vmatprep.subr.bf16.mxu0 0
      %1168 = vmatpush1.bf16.xpose.msra.mxu0 0
      %1169 = vmatprep.subr.bf16.mxu0 0
      %1170 = vmatpush1.bf16.xpose.msra.mxu0 0
      %1171 = vmatprep.subr.bf16.mxu0 0
      %1172 = vmatpush1.bf16.xpose.msra.mxu0 0
      %1173 = vmatprep.subr.bf16.mxu0 0
      %1174 = vmatpush1.bf16.xpose.msra.mxu0 0
      %1175 = vmatprep.subr.bf16.mxu0 0
      %1176 = vmatpush1.bf16.xpose.msra.mxu0 0
      %1177 = vmatprep.subr.bf16.mxu0 0
      %1178 = vmatpush1.bf16.xpose.msra.mxu0 %v1163
      %1179 = vmatprep.subr.bf16.mxu0 0
      %1180 = vmatpush1.bf16.xpose.msra.mxu0 %v1160
      %1181 = vmatprep.subr.bf16.mxu0 0
      %1182 = vmatpush2.bf16.xpose.msra.mxu0 0
      %1183 = vmatprep.subr.bf16.mxu0 0
      %1184 = vmatpush2.bf16.xpose.msra.mxu0 0
      %1185 = vmatprep.subr.bf16.mxu0 0
      %1186 = vmatpush2.bf16.xpose.msra.mxu0 0
      %1187 = vmatprep.subr.bf16.mxu0 0
      %1188 = vmatpush2.bf16.xpose.msra.mxu0 0
      %1189 = vmatprep.subr.bf16.mxu0 0
      %1190 = vmatpush2.bf16.xpose.msra.mxu0 0
      %1191 = vmatprep.subr.bf16.mxu0 0
      %1192 = vmatpush2.bf16.xpose.msra.mxu0 0
      %1193 = vmatprep.subr.bf16.mxu0 0
      %1194 = vmatpush2.bf16.xpose.msra.mxu0 0
      %1195 = vmatprep.subr.bf16.mxu0 0
      %1196 = vmatpush2.bf16.xpose.msra.mxu0 0
      %1197 = vmatprep.mubr.bf16.mxu0 0
      %1198 = vmatmul.mubr.bf16.gmra.mxu0 %v1154
      %v1199 = vpop.f32.mrf.mxu0
      %v1200 = vadd.f32 0.0, %v1199
      %v1201 = vpop.f32.mrf.mxu0
      %v1202 = vpop.f32.mrf.mxu0
      %v1203 = vadd.f32 0.0, %v1202
      %v1204 = vpop.f32.mrf.mxu0
      %1205 = vmatprep.mubr.bf16.mxu0 0
      %1206 = vmatmul.mubr.bf16.gmra.mxu0 %v1157
      %v1207 = vpop.f32.mrf.mxu0
      %v1208 = vadd.f32 0.0, %v1207
      %v1209 = vpop.f32.mrf.mxu0
      %v1210 = vpop.f32.mrf.mxu0
      %v1211 = vpop.f32.mrf.mxu0
      %1212 = vdwg.mxu0
      %v1213 = vsel %vm876, %v1200, -inf
      %1214 = vmax.xlane.f32.xlu0 %v1213
      %v1215 = vpop.xlane.xlu0 %1214
      %v1216 = vsel %vm876, %v1203, -inf
      %1217 = vmax.xlane.f32.xlu0 %v1216
      %v1218 = vpop.xlane.xlu0 %1217
      %v1219 = vsel %vm883, %v1208, -inf
      %1220 = vmax.xlane.f32.xlu0 %v1219
      %v1221 = vpop.xlane.xlu0 %1220
      %v1222 = vsub.f32 %v1200, %v1215
      %v1223 = vsub.f32 %v1203, %v1218
      %v1224 = vsub.f32 %v1208, %v1221
      %v1225 = vmul.f32 %v1222, 1.442695
      %v1226 = vpow.pop %v1225
      %v1227 = vmul.f32 %v1223, 1.442695
      %v1228 = vpow.pop %v1227
      %v1229 = vmul.f32 %v1224, 1.442695
      %v1230 = vpow.pop %v1229
      %v1231 = vsel %vm876, %v1226, 0.0
      %1232 = vadd.xlane.f32.xlu0 %v1231
      %v1233 = vpop.xlane.xlu0 %1232
      %v1234 = vsel %vm876, %v1228, 0.0
      %1235 = vadd.xlane.f32.xlu0 %v1234
      %v1236 = vpop.xlane.xlu0 %1235
      %v1237 = vsel %vm883, %v1230, 0.0
      %1238 = vadd.xlane.f32.xlu0 %v1237
      %v1239 = vpop.xlane.xlu0 %1238
      %v1240 = vrcp.pop %v1233
      %v1241 = vrcp.pop %v1236
      %v1242 = vrcp.pop %v1239
      %v1243 = vpack.c.bf16 %v1228, %v1226
      %v1244 = vpack.c.bf16 %v1230, %v1230
      %1245 = vrot.lane.b32.xlu0 %v807, 48
      %v1246 = vpop.permute.xlu0 %1245
      %1247 = vrot.lane.b32.xlu0 %v808, 48
      %v1248 = vpop.permute.xlu0 %1247
      %v1251 = vsel %vm876, %v1243, 0
      %v1254 = vsel %vm876, %v1244, 0
      %v1257 = vand.u32 %v1248, %v923
      %1259 = vmatprep.subr.bf16.mxu0 0
      %1260 = vmatpush1.bf16.msra.mxu0 0
      %1261 = vmatprep.subr.bf16.mxu0 0
      %1262 = vmatpush1.bf16.msra.mxu0 0
      %1263 = vmatprep.subr.bf16.mxu0 0
      %1264 = vmatpush1.bf16.msra.mxu0 0
      %1265 = vmatprep.subr.bf16.mxu0 0
      %1266 = vmatpush1.bf16.msra.mxu0 0
      %1267 = vmatprep.subr.bf16.mxu0 0
      %1268 = vmatpush1.bf16.msra.mxu0 0
      %1269 = vmatprep.subr.bf16.mxu0 0
      %1270 = vmatpush1.bf16.msra.mxu0 0
      %1271 = vmatprep.subr.bf16.mxu0 0
      %1272 = vmatpush1.bf16.msra.mxu0 %v1257
      %1273 = vmatprep.subr.bf16.mxu0 0
      %1274 = vmatpush1.bf16.msra.mxu0 %v1246
      %1275 = vmatprep.subr.bf16.mxu0 0
      %1276 = vmatpush2.bf16.msra.mxu0 0
      %1277 = vmatprep.subr.bf16.mxu0 0
      %1278 = vmatpush2.bf16.msra.mxu0 0
      %1279 = vmatprep.subr.bf16.mxu0 0
      %1280 = vmatpush2.bf16.msra.mxu0 0
      %1281 = vmatprep.subr.bf16.mxu0 0
      %1282 = vmatpush2.bf16.msra.mxu0 0
      %1283 = vmatprep.subr.bf16.mxu0 0
      %1284 = vmatpush2.bf16.msra.mxu0 0
      %1285 = vmatprep.subr.bf16.mxu0 0
      %1286 = vmatpush2.bf16.msra.mxu0 0
      %1287 = vmatprep.subr.bf16.mxu0 0
      %1288 = vmatpush2.bf16.msra.mxu0 0
      %1289 = vmatprep.subr.bf16.mxu0 0
      %1290 = vmatpush2.bf16.msra.mxu0 0
      %1291 = vmatprep.mubr.bf16.mxu0 0
      %1292 = vmatmul.mubr.bf16.gmra.mxu0 %v1251
      %v1293 = vpop.f32.mrf.mxu0
      %v1294 = vadd.f32 0.0, %v1293
      %v1295 = vpop.f32.mrf.mxu0
      %v1296 = vpop.f32.mrf.mxu0
      %v1297 = vadd.f32 0.0, %v1296
      %v1298 = vpop.f32.mrf.mxu0
      %1299 = vmatprep.mubr.bf16.mxu0 0
      %1300 = vmatmul.mubr.bf16.gmra.mxu0 %v1254
      %v1301 = vpop.f32.mrf.mxu0
      %v1302 = vadd.f32 0.0, %v1301
      %v1303 = vpop.f32.mrf.mxu0
      %v1304 = vpop.f32.mrf.mxu0
      %v1305 = vpop.f32.mrf.mxu0
      %1306 = vdwg.mxu0
      %v1307 = vmul.f32 %v1294, %v1240
      %v1308 = vmul.f32 %v1297, %v1241
      %v1309 = vmul.f32 %v1302, %v1242
      %1310 = vrot.lane.b32.xlu0 %v805, 104
      %v1311 = vpop.permute.xlu0 %1310
      %1312 = vrot.lane.b32.xlu0 %v806, 104
      %v1313 = vpop.permute.xlu0 %1312
      %1314 = vrot.lane.b32.xlu0 %v807, 72
      %v1315 = vpop.permute.xlu0 %1314
      %1316 = vrot.lane.b32.xlu0 %v808, 72
      %v1317 = vpop.permute.xlu0 %1316
      %v1319 = vsel %vm815, %v1311, 0
      %v1322 = vsel %vm815, %v1313, 0
      %v1325 = vsel %vm815, %v1315, 0
      %v1328 = vsel %vm815, %v1317, 0
      %1330 = vmatprep.subr.bf16.mxu0 0
      %1331 = vmatpush1.bf16.xpose.msra.mxu0 0
      %1332 = vmatprep.subr.bf16.mxu0 0
      %1333 = vmatpush1.bf16.xpose.msra.mxu0 0
      %1334 = vmatprep.subr.bf16.mxu0 0
      %1335 = vmatpush1.bf16.xpose.msra.mxu0 0
      %1336 = vmatprep.subr.bf16.mxu0 0
      %1337 = vmatpush1.bf16.xpose.msra.mxu0 0
      %1338 = vmatprep.subr.bf16.mxu0 0
      %1339 = vmatpush1.bf16.xpose.msra.mxu0 0
      %1340 = vmatprep.subr.bf16.mxu0 0
      %1341 = vmatpush1.bf16.xpose.msra.mxu0 0
      %1342 = vmatprep.subr.bf16.mxu0 0
      %1343 = vmatpush1.bf16.xpose.msra.mxu0 %v1328
      %1344 = vmatprep.subr.bf16.mxu0 0
      %1345 = vmatpush1.bf16.xpose.msra.mxu0 %v1325
      %1346 = vmatprep.subr.bf16.mxu0 0
      %1347 = vmatpush2.bf16.xpose.msra.mxu0 0
      %1348 = vmatprep.subr.bf16.mxu0 0
      %1349 = vmatpush2.bf16.xpose.msra.mxu0 0
      %1350 = vmatprep.subr.bf16.mxu0 0
      %1351 = vmatpush2.bf16.xpose.msra.mxu0 0
      %1352 = vmatprep.subr.bf16.mxu0 0
      %1353 = vmatpush2.bf16.xpose.msra.mxu0 0
      %1354 = vmatprep.subr.bf16.mxu0 0
      %1355 = vmatpush2.bf16.xpose.msra.mxu0 0
      %1356 = vmatprep.subr.bf16.mxu0 0
      %1357 = vmatpush2.bf16.xpose.msra.mxu0 0
      %1358 = vmatprep.subr.bf16.mxu0 0
      %1359 = vmatpush2.bf16.xpose.msra.mxu0 0
      %1360 = vmatprep.subr.bf16.mxu0 0
      %1361 = vmatpush2.bf16.xpose.msra.mxu0 0
      %1362 = vmatprep.mubr.bf16.mxu0 0
      %1363 = vmatmul.mubr.bf16.gmra.mxu0 %v1319
      %v1364 = vpop.f32.mrf.mxu0
      %v1365 = vadd.f32 0.0, %v1364
      %v1366 = vpop.f32.mrf.mxu0
      %v1367 = vpop.f32.mrf.mxu0
      %v1368 = vadd.f32 0.0, %v1367
      %v1369 = vpop.f32.mrf.mxu0
      %1370 = vmatprep.mubr.bf16.mxu0 0
      %1371 = vmatmul.mubr.bf16.gmra.mxu0 %v1322
      %v1372 = vpop.f32.mrf.mxu0
      %v1373 = vadd.f32 0.0, %v1372
      %v1374 = vpop.f32.mrf.mxu0
      %v1375 = vpop.f32.mrf.mxu0
      %v1376 = vpop.f32.mrf.mxu0
      %1377 = vdwg.mxu0
      %v1378 = vsel %vm876, %v1365, -inf
      %1379 = vmax.xlane.f32.xlu0 %v1378
      %v1380 = vpop.xlane.xlu0 %1379
      %v1381 = vsel %vm876, %v1368, -inf
      %1382 = vmax.xlane.f32.xlu0 %v1381
      %v1383 = vpop.xlane.xlu0 %1382
      %v1384 = vsel %vm883, %v1373, -inf
      %1385 = vmax.xlane.f32.xlu0 %v1384
      %v1386 = vpop.xlane.xlu0 %1385
      %v1387 = vsub.f32 %v1365, %v1380
      %v1388 = vsub.f32 %v1368, %v1383
      %v1389 = vsub.f32 %v1373, %v1386
      %v1390 = vmul.f32 %v1387, 1.442695
      %v1391 = vpow.pop %v1390
      %v1392 = vmul.f32 %v1388, 1.442695
      %v1393 = vpow.pop %v1392
      %v1394 = vmul.f32 %v1389, 1.442695
      %v1395 = vpow.pop %v1394
      %v1396 = vsel %vm876, %v1391, 0.0
      %1397 = vadd.xlane.f32.xlu0 %v1396
      %v1398 = vpop.xlane.xlu0 %1397
      %v1399 = vsel %vm876, %v1393, 0.0
      %1400 = vadd.xlane.f32.xlu0 %v1399
      %v1401 = vpop.xlane.xlu0 %1400
      %v1402 = vsel %vm883, %v1395, 0.0
      %1403 = vadd.xlane.f32.xlu0 %v1402
      %v1404 = vpop.xlane.xlu0 %1403
      %v1405 = vrcp.pop %v1398
      %v1406 = vrcp.pop %v1401
      %v1407 = vrcp.pop %v1404
      %v1408 = vpack.c.bf16 %v1393, %v1391
      %v1409 = vpack.c.bf16 %v1395, %v1395
      %1410 = vrot.lane.b32.xlu0 %v807, 40
      %v1411 = vpop.permute.xlu0 %1410
      %1412 = vrot.lane.b32.xlu0 %v808, 40
      %v1413 = vpop.permute.xlu0 %1412
      %v1416 = vsel %vm876, %v1408, 0
      %v1419 = vsel %vm876, %v1409, 0
      %v1422 = vand.u32 %v1413, %v923
      %1424 = vmatprep.subr.bf16.mxu0 0
      %1425 = vmatpush1.bf16.msra.mxu0 0
      %1426 = vmatprep.subr.bf16.mxu0 0
      %1427 = vmatpush1.bf16.msra.mxu0 0
      %1428 = vmatprep.subr.bf16.mxu0 0
      %1429 = vmatpush1.bf16.msra.mxu0 0
      %1430 = vmatprep.subr.bf16.mxu0 0
      %1431 = vmatpush1.bf16.msra.mxu0 0
      %1432 = vmatprep.subr.bf16.mxu0 0
      %1433 = vmatpush1.bf16.msra.mxu0 0
      %1434 = vmatprep.subr.bf16.mxu0 0
      %1435 = vmatpush1.bf16.msra.mxu0 0
      %1436 = vmatprep.subr.bf16.mxu0 0
      %1437 = vmatpush1.bf16.msra.mxu0 %v1422
      %1438 = vmatprep.subr.bf16.mxu0 0
      %1439 = vmatpush1.bf16.msra.mxu0 %v1411
      %1440 = vmatprep.subr.bf16.mxu0 0
      %1441 = vmatpush2.bf16.msra.mxu0 0
      %1442 = vmatprep.subr.bf16.mxu0 0
      %1443 = vmatpush2.bf16.msra.mxu0 0
      %1444 = vmatprep.subr.bf16.mxu0 0
      %1445 = vmatpush2.bf16.msra.mxu0 0
      %1446 = vmatprep.subr.bf16.mxu0 0
      %1447 = vmatpush2.bf16.msra.mxu0 0
      %1448 = vmatprep.subr.bf16.mxu0 0
      %1449 = vmatpush2.bf16.msra.mxu0 0
      %1450 = vmatprep.subr.bf16.mxu0 0
      %1451 = vmatpush2.bf16.msra.mxu0 0
      %1452 = vmatprep.subr.bf16.mxu0 0
      %1453 = vmatpush2.bf16.msra.mxu0 0
      %1454 = vmatprep.subr.bf16.mxu0 0
      %1455 = vmatpush2.bf16.msra.mxu0 0
      %1456 = vmatprep.mubr.bf16.mxu0 0
      %1457 = vmatmul.mubr.bf16.gmra.mxu0 %v1416
      %v1458 = vpop.f32.mrf.mxu0
      %v1459 = vadd.f32 0.0, %v1458
      %v1460 = vpop.f32.mrf.mxu0
      %v1461 = vpop.f32.mrf.mxu0
      %v1462 = vadd.f32 0.0, %v1461
      %v1463 = vpop.f32.mrf.mxu0
      %1464 = vmatprep.mubr.bf16.mxu0 0
      %1465 = vmatmul.mubr.bf16.gmra.mxu0 %v1419
      %v1466 = vpop.f32.mrf.mxu0
      %v1467 = vadd.f32 0.0, %v1466
      %v1468 = vpop.f32.mrf.mxu0
      %v1469 = vpop.f32.mrf.mxu0
      %v1470 = vpop.f32.mrf.mxu0
      %1471 = vdwg.mxu0
      %v1472 = vmul.f32 %v1459, %v1405
      %v1473 = vmul.f32 %v1462, %v1406
      %v1474 = vmul.f32 %v1467, %v1407
      %1478 = vrot.lane.b32.xlu0 %v1142, 8
      %v1479 = vpop.permute.xlu0 %1478
      %1480 = vrot.lane.b32.xlu0 %v1143, 8
      %v1481 = vpop.permute.xlu0 %1480
      %1482 = vrot.lane.b32.xlu0 %v1144, 8
      %v1483 = vpop.permute.xlu0 %1482
      %1490 = vrot.lane.b32.xlu0 %v1307, 16
      %v1491 = vpop.permute.xlu0 %1490
      %1492 = vrot.lane.b32.xlu0 %v1308, 16
      %v1493 = vpop.permute.xlu0 %1492
      %1494 = vrot.lane.b32.xlu0 %v1309, 16
      %v1495 = vpop.permute.xlu0 %1494
      %1502 = vrot.lane.b32.xlu0 %v1472, 24
      %v1503 = vpop.permute.xlu0 %1502
      %1504 = vrot.lane.b32.xlu0 %v1473, 24
      %v1505 = vpop.permute.xlu0 %1504
      %1506 = vrot.lane.b32.xlu0 %v1474, 24
      %v1507 = vpop.permute.xlu0 %1506
      %v1511 = vsel %vm815, %v975, %v1479
      %v1512 = vsel %vm815, %v976, %v1481
      %v1513 = vsel %vm815, %v977, %v1483
      %vm1514 = vcmask 130048
      %v1515 = vsel %vm1514, %v1511, %v1491
      %v1516 = vsel %vm1514, %v1512, %v1493
      %v1517 = vsel %vm1514, %v1513, %v1495
      %vm1518 = vcmask 195584
      %v1519 = vsel %vm1518, %v1515, %v1503
      %v1520 = vsel %vm1518, %v1516, %v1505
      %v1521 = vsel %vm1518, %v1517, %v1507
      %v1522 = vpack.c.bf16 %v1520, %v1519
      %v1523 = vpack.c.bf16 %v1521, %v1521
      %v1524 = vld [vmem:[%s614] sm:$0xf]
      %v1525 = vld [vmem:[%s614 + $0x4] sm:$0xf]
      %v1526 = vld [vmem:[%s614 + $0x8] sm:$0xf]
      %v1527 = vld [vmem:[%s614 + $0xc] sm:$0xf]
      %v1532 = vunpack.c.l.b16 %v1524
      %v1533 = vunpack.c.l.b16 %v1525
      %v1534 = vunpack.c.l.b16 %v1526
      %v1535 = vunpack.c.l.b16 %v1527
      %v1536 = vpack.c.b16 %v1533, %v1532
      %v1537 = vpack.c.b16 %v1535, %v1534
      %v1541 = vsel %vm663, %v1522, 0
      %v1544 = vsel %vm663, %v1523, 0
      %1546 = vmatprep.subr.bf16.mxu0 0
      %1547 = vmatpush1.bf16.msra.mxu0 0
      %1548 = vmatprep.subr.bf16.mxu0 0
      %1549 = vmatpush1.bf16.msra.mxu0 0
      %1550 = vmatprep.subr.bf16.mxu0 0
      %1551 = vmatpush1.bf16.msra.mxu0 0
      %1552 = vmatprep.subr.bf16.mxu0 0
      %1553 = vmatpush1.bf16.msra.mxu0 0
      %1554 = vmatprep.subr.bf16.mxu0 0
      %1555 = vmatpush1.bf16.msra.mxu0 0
      %1556 = vmatprep.subr.bf16.mxu0 0
      %1557 = vmatpush1.bf16.msra.mxu0 0
      %1558 = vmatprep.subr.bf16.mxu0 0
      %1559 = vmatpush1.bf16.msra.mxu0 %v1537
      %1560 = vmatprep.subr.bf16.mxu0 0
      %1561 = vmatpush1.bf16.msra.mxu0 %v1536
      %1562 = vmatprep.subr.bf16.mxu0 0
      %1563 = vmatpush2.bf16.msra.mxu0 0
      %1564 = vmatprep.subr.bf16.mxu0 0
      %1565 = vmatpush2.bf16.msra.mxu0 0
      %1566 = vmatprep.subr.bf16.mxu0 0
      %1567 = vmatpush2.bf16.msra.mxu0 0
      %1568 = vmatprep.subr.bf16.mxu0 0
      %1569 = vmatpush2.bf16.msra.mxu0 0
      %1570 = vmatprep.subr.bf16.mxu0 0
      %1571 = vmatpush2.bf16.msra.mxu0 0
      %1572 = vmatprep.subr.bf16.mxu0 0
      %1573 = vmatpush2.bf16.msra.mxu0 0
      %1574 = vmatprep.subr.bf16.mxu0 0
      %1575 = vmatpush2.bf16.msra.mxu0 0
      %1576 = vmatprep.subr.bf16.mxu0 0
      %1577 = vmatpush2.bf16.msra.mxu0 0
      %1578 = vmatprep.mubr.bf16.mxu0 0
      %1579 = vmatmul.mubr.bf16.gmra.mxu0 %v1541
      %v1580 = vpop.f32.mrf.mxu0
      %v1581 = vadd.f32 0.0, %v1580
      %v1582 = vpop.f32.mrf.mxu0
      %v1583 = vpop.f32.mrf.mxu0
      %v1584 = vadd.f32 0.0, %v1583
      %v1585 = vpop.f32.mrf.mxu0
      %1586 = vmatprep.mubr.bf16.mxu0 0
      %1587 = vmatmul.mubr.bf16.gmra.mxu0 %v1544
      %v1588 = vpop.f32.mrf.mxu0
      %v1589 = vadd.f32 0.0, %v1588
      %v1590 = vpop.f32.mrf.mxu0
      %v1591 = vpop.f32.mrf.mxu0
      %v1592 = vpop.f32.mrf.mxu0
      %1593 = vdwg.mxu0
      %v1594 = vadd.f32 %v658, %v1581
      %v1595 = vadd.f32 %v659, %v1584
      %v1596 = vadd.f32 %v660, %v1589
      %v1597 = vld [vmem:[%s617] sm:$0x1]
      %v1599 = vlaneseq
      %v1600 = vshrl.u32 %v1599, 7
      %v1601 = vsub.s32 0, %v1600
      %v1602 = vrot.slane %v1597, %v1601
      %v1604 = vadd.f32 %v1594, %v1602
      %v1605 = vadd.f32 %v1595, %v1602
      %v1606 = vadd.f32 %v1596, %v1602
      %v1607 = vld [vmem:[%s620] sm:$0x1]
      %v1608 = vld [vmem:[%s623] sm:$0x1]
      %v1609 = vsel %vm663, %v1604, 0.0
      %1610 = vadd.xlane.f32.xlu0 %v1609
      %v1611 = vpop.xlane.xlu0 %1610
      %v1612 = vsel %vm663, %v1605, 0.0
      %1613 = vadd.xlane.f32.xlu0 %v1612
      %v1614 = vpop.xlane.xlu0 %1613
      %v1615 = vsel %vm670, %v1606, 0.0
      %1616 = vadd.xlane.f32.xlu0 %v1615
      %v1617 = vpop.xlane.xlu0 %1616
      %v1618 = vmul.f32 %v1611, %v674
      %v1619 = vmul.f32 %v1614, %v674
      %v1620 = vmul.f32 %v1617, %v674
      %v1621 = vsub.f32 %v1604, %v1618
      %v1622 = vsub.f32 %v1605, %v1619
      %v1623 = vsub.f32 %v1606, %v1620
      %v1624 = vmul.f32 %v1621, %v1621
      %v1625 = vmul.f32 %v1622, %v1622
      %v1626 = vmul.f32 %v1623, %v1623
      %v1627 = vsel %vm663, %v1624, 0.0
      %1628 = vadd.xlane.f32.xlu0 %v1627
      %v1629 = vpop.xlane.xlu0 %1628
      %v1630 = vsel %vm663, %v1625, 0.0
      %1631 = vadd.xlane.f32.xlu0 %v1630
      %v1632 = vpop.xlane.xlu0 %1631
      %v1633 = vsel %vm670, %v1626, 0.0
      %1634 = vadd.xlane.f32.xlu0 %v1633
      %v1635 = vpop.xlane.xlu0 %1634
      %v1636 = vmul.f32 %v1629, %v674
      %v1637 = vmul.f32 %v1632, %v674
      %v1638 = vmul.f32 %v1635, %v674
      %v1639 = vadd.f32 %v1636, 1e-05
      %v1640 = vadd.f32 %v1637, 1e-05
      %v1641 = vadd.f32 %v1638, 1e-05
      %v1642 = vrsqrt.pop %v1639
      %v1643 = vrsqrt.pop %v1640
      %v1644 = vrsqrt.pop %v1641
      %v1645 = vmul.f32 %v1621, %v1642
      %v1646 = vmul.f32 %v1622, %v1643
      %v1647 = vmul.f32 %v1623, %v1644
      %v1649 = vlaneseq
      %v1650 = vshrl.u32 %v1649, 7
      %v1651 = vsub.s32 0, %v1650
      %v1652 = vrot.slane %v1607, %v1651
      %v1654 = vmul.f32 %v1645, %v1652
      %v1655 = vmul.f32 %v1646, %v1652
      %v1656 = vmul.f32 %v1647, %v1652
      %v1658 = vlaneseq
      %v1659 = vshrl.u32 %v1658, 7
      %v1660 = vsub.s32 0, %v1659
      %v1661 = vrot.slane %v1608, %v1660
      %v1663 = vadd.f32 %v1654, %v1661
      %v1664 = vadd.f32 %v1655, %v1661
      %v1665 = vadd.f32 %v1656, %v1661
      %v1666 = vpack.c.bf16 %v1664, %v1663
      %v1667 = vpack.c.bf16 %v1665, %v1665
      %v1668 = vld [vmem:[%s628] sm:$0xf]
      %v1669 = vld [vmem:[%s628 + $0x4] sm:$0xf]
      %v1670 = vld [vmem:[%s628 + $0x8] sm:$0xf]
      %v1671 = vld [vmem:[%s628 + $0xc] sm:$0xf]
      %v1672 = vld [vmem:[%s631] sm:$0x1]
      %v1674 = vlaneseq
      %v1675 = vshrl.u32 %v1674, 7
      %v1676 = vsub.s32 0, %v1675
      %v1677 = vrot.slane %v1672, %v1676
      %v1683 = vunpack.c.l.b16 %v1668
      %v1684 = vunpack.c.l.b16 %v1669
      %v1685 = vunpack.c.l.b16 %v1670
      %v1686 = vunpack.c.l.b16 %v1671
      %v1687 = vpack.c.b16 %v1684, %v1683
      %v1688 = vpack.c.b16 %v1686, %v1685
      %v1692 = vsel %vm663, %v1666, 0
      %v1695 = vsel %vm663, %v1667, 0
      %1697 = vmatprep.subr.bf16.mxu0 0
      %1698 = vmatpush1.bf16.msra.mxu0 0
      %1699 = vmatprep.subr.bf16.mxu0 0
      %1700 = vmatpush1.bf16.msra.mxu0 0
      %1701 = vmatprep.subr.bf16.mxu0 0
      %1702 = vmatpush1.bf16.msra.mxu0 0
      %1703 = vmatprep.subr.bf16.mxu0 0
      %1704 = vmatpush1.bf16.msra.mxu0 0
      %1705 = vmatprep.subr.bf16.mxu0 0
      %1706 = vmatpush1.bf16.msra.mxu0 0
      %1707 = vmatprep.subr.bf16.mxu0 0
      %1708 = vmatpush1.bf16.msra.mxu0 0
      %1709 = vmatprep.subr.bf16.mxu0 0
      %1710 = vmatpush1.bf16.msra.mxu0 %v1688
      %1711 = vmatprep.subr.bf16.mxu0 0
      %1712 = vmatpush1.bf16.msra.mxu0 %v1687
      %1713 = vmatprep.subr.bf16.mxu0 0
      %1714 = vmatpush2.bf16.msra.mxu0 0
      %1715 = vmatprep.subr.bf16.mxu0 0
      %1716 = vmatpush2.bf16.msra.mxu0 0
      %1717 = vmatprep.subr.bf16.mxu0 0
      %1718 = vmatpush2.bf16.msra.mxu0 0
      %1719 = vmatprep.subr.bf16.mxu0 0
      %1720 = vmatpush2.bf16.msra.mxu0 0
      %1721 = vmatprep.subr.bf16.mxu0 0
      %1722 = vmatpush2.bf16.msra.mxu0 0
      %1723 = vmatprep.subr.bf16.mxu0 0
      %1724 = vmatpush2.bf16.msra.mxu0 0
      %1725 = vmatprep.subr.bf16.mxu0 0
      %1726 = vmatpush2.bf16.msra.mxu0 0
      %1727 = vmatprep.subr.bf16.mxu0 0
      %1728 = vmatpush2.bf16.msra.mxu0 0
      %1729 = vmatprep.mubr.bf16.mxu0 0
      %1730 = vmatmul.mubr.bf16.gmra.mxu0 %v1692
      %v1731 = vpop.f32.mrf.mxu0
      %v1732 = vadd.f32 %v1677, %v1731
      %v1733 = vpop.f32.mrf.mxu0
      %v1734 = vpop.f32.mrf.mxu0
      %v1735 = vadd.f32 %v1677, %v1734
      %v1736 = vpop.f32.mrf.mxu0
      %1737 = vmatprep.mubr.bf16.mxu0 0
      %1738 = vmatmul.mubr.bf16.gmra.mxu0 %v1695
      %v1739 = vpop.f32.mrf.mxu0
      %v1740 = vadd.f32 %v1677, %v1739
      %v1741 = vpop.f32.mrf.mxu0
      %v1742 = vpop.f32.mrf.mxu0
      %v1743 = vpop.f32.mrf.mxu0
      %1744 = vdwg.mxu0
      %v1745 = vmul.f32 %v1732, %v1732
      %v1746 = vmul.f32 %v1735, %v1735
      %v1747 = vmul.f32 %v1740, %v1740
      %v1748 = vmul.f32 %v1732, %v1745
      %v1749 = vmul.f32 %v1735, %v1746
      %v1750 = vmul.f32 %v1740, %v1747
      %v1751 = vmul.f32 %v1748, 0.044715
      %v1752 = vmul.f32 %v1749, 0.044715
      %v1753 = vmul.f32 %v1750, 0.044715
      %v1754 = vadd.f32 %v1732, %v1751
      %v1755 = vadd.f32 %v1735, %v1752
      %v1756 = vadd.f32 %v1740, %v1753
      %v1757 = vmul.f32 %v1754, 0.7978846
      %v1758 = vmul.f32 %v1755, 0.7978846
      %v1759 = vmul.f32 %v1756, 0.7978846
      %v1760 = vtanh.pop %v1757
      %v1761 = vtanh.pop %v1758
      %v1762 = vtanh.pop %v1759
      %v1763 = vadd.f32 %v1760, 1.0
      %v1764 = vadd.f32 %v1761, 1.0
      %v1765 = vadd.f32 %v1762, 1.0
      %v1766 = vmul.f32 %v1763, 0.5
      %v1767 = vmul.f32 %v1764, 0.5
      %v1768 = vmul.f32 %v1765, 0.5
      %v1769 = vmul.f32 %v1732, %v1766
      %v1770 = vmul.f32 %v1735, %v1767
      %v1771 = vmul.f32 %v1740, %v1768
      %v1772 = vpack.c.bf16 %v1770, %v1769
      %v1773 = vpack.c.bf16 %v1771, %v1771
      %v1774 = vld [vmem:[%s636] sm:$0xf]
      %v1775 = vld [vmem:[%s636 + $0x4] sm:$0xf]
      %v1776 = vld [vmem:[%s636 + $0x8] sm:$0xf]
      %v1777 = vld [vmem:[%s636 + $0xc] sm:$0xf]
      %v1778 = vld [vmem:[%s636 + $0x10] sm:$0xf]
      %v1779 = vld [vmem:[%s636 + $0x14] sm:$0xf]
      %v1780 = vld [vmem:[%s636 + $0x18] sm:$0xf]
      %v1781 = vld [vmem:[%s636 + $0x1c] sm:$0xf]
      %v1782 = vld [vmem:[%s639] sm:$0x1]
      %v1784 = vlaneseq
      %v1785 = vshrl.u32 %v1784, 7
      %v1786 = vsub.s32 0, %v1785
      %v1787 = vrot.slane %v1782, %v1786
      %v1797 = vunpack.c.l.b16 %v1774
      %v1798 = vunpack.c.l.b16 %v1775
      %v1799 = vunpack.c.l.b16 %v1776
      %v1800 = vunpack.c.l.b16 %v1777
      %v1801 = vunpack.c.l.b16 %v1778
      %v1802 = vunpack.c.l.b16 %v1779
      %v1803 = vunpack.c.l.b16 %v1780
      %v1804 = vunpack.c.l.b16 %v1781
      %v1805 = vpack.c.b16 %v1798, %v1797
      %v1806 = vpack.c.b16 %v1800, %v1799
      %v1807 = vpack.c.b16 %v1802, %v1801
      %v1808 = vpack.c.b16 %v1804, %v1803
      %vm1813 = vcmask 523264
      %v1815 = vsel %vm1813, %v1772, 0
      %v1818 = vsel %vm1813, %v1773, 0
      %1820 = vmatprep.subr.bf16.mxu0 0
      %1821 = vmatpush1.bf16.msra.mxu0 0
      %1822 = vmatprep.subr.bf16.mxu0 0
      %1823 = vmatpush1.bf16.msra.mxu0 0
      %1824 = vmatprep.subr.bf16.mxu0 0
      %1825 = vmatpush1.bf16.msra.mxu0 0
      %1826 = vmatprep.subr.bf16.mxu0 0
      %1827 = vmatpush1.bf16.msra.mxu0 0
      %1828 = vmatprep.subr.bf16.mxu0 0
      %1829 = vmatpush1.bf16.msra.mxu0 %v1808
      %1830 = vmatprep.subr.bf16.mxu0 0
      %1831 = vmatpush1.bf16.msra.mxu0 %v1807
      %1832 = vmatprep.subr.bf16.mxu0 0
      %1833 = vmatpush1.bf16.msra.mxu0 %v1806
      %1834 = vmatprep.subr.bf16.mxu0 0
      %1835 = vmatpush1.bf16.msra.mxu0 %v1805
      %1836 = vmatprep.subr.bf16.mxu0 0
      %1837 = vmatpush2.bf16.msra.mxu0 0
      %1838 = vmatprep.subr.bf16.mxu0 0
      %1839 = vmatpush2.bf16.msra.mxu0 0
      %1840 = vmatprep.subr.bf16.mxu0 0
      %1841 = vmatpush2.bf16.msra.mxu0 0
      %1842 = vmatprep.subr.bf16.mxu0 0
      %1843 = vmatpush2.bf16.msra.mxu0 0
      %1844 = vmatprep.subr.bf16.mxu0 0
      %1845 = vmatpush2.bf16.msra.mxu0 0
      %1846 = vmatprep.subr.bf16.mxu0 0
      %1847 = vmatpush2.bf16.msra.mxu0 0
      %1848 = vmatprep.subr.bf16.mxu0 0
      %1849 = vmatpush2.bf16.msra.mxu0 0
      %1850 = vmatprep.subr.bf16.mxu0 0
      %1851 = vmatpush2.bf16.msra.mxu0 0
      %1852 = vmatprep.mubr.bf16.mxu0 0
      %1853 = vmatmul.mubr.bf16.gmra.mxu0 %v1815
      %v1854 = vpop.f32.mrf.mxu0
      %v1855 = vadd.f32 %v1787, %v1854
      %v1856 = vpop.f32.mrf.mxu0
      %v1857 = vpop.f32.mrf.mxu0
      %v1858 = vadd.f32 %v1787, %v1857
      %v1859 = vpop.f32.mrf.mxu0
      %1860 = vmatprep.mubr.bf16.mxu0 0
      %1861 = vmatmul.mubr.bf16.gmra.mxu0 %v1818
      %v1862 = vpop.f32.mrf.mxu0
      %v1863 = vadd.f32 %v1787, %v1862
      %v1864 = vpop.f32.mrf.mxu0
      %v1865 = vpop.f32.mrf.mxu0
      %v1866 = vpop.f32.mrf.mxu0
      %1867 = vdwg.mxu0
      %v1868 = vadd.f32 %v1604, %v1855
      %v1869 = vadd.f32 %v1605, %v1858
      %v1870 = vadd.f32 %v1606, %v1863
      %1871 = vst.msk [vmem:[#allocation2] sm:$0xff] %vm663, %v1868
      %1872 = vst.msk [vmem:[#allocation2 + $0x8] sm:$0xff] %vm663, %v1869
      %1873 = vst.msk [vmem:[#allocation2 + $0x10] sm:$0x1] %vm670, %v1870
      %p1874 = scmp.eq.s32.totalorder %s29, 1
      // Predicated region
      $region77: #{vit_model_forward.4} parent=71 // pred_check
        %p1875 = pneg %p1874
      $region78: #{vit_model_forward.4} parent=71 // pred_check_branch
        %1877 = sbr.rel (%p1875) target = $region80
      $region79: #{vit_model_forward.4} parent=71 // pred_region
        %1878 = vst.msk [vmem:[%s644] sm:$0xff] %vm663, %v1868
        %1879 = vst.msk [vmem:[%s644 + $0x8] sm:$0xff] %vm663, %v1869
        %1880 = vst.msk [vmem:[%s644 + $0x10] sm:$0x1] %vm670, %v1870
      $region80: #{vit_model_forward.4} parent=71 // pred_fallthru
        _
      %p1881 = scmp.lt.s32.totalorder %s28, 1
      %s1882 = scalar_select %p1881, %s28, 1
      %s1883 = smul.addr %s1882, 3
      %s1884 = smul.addr %s1883, 8
      %s1885 = scalar_lea.vmem %s13, %s1884
      // Predicated region
      $region81: #{vit_model_forward.4} parent=71 // pred_check
        %p1886 = pneg %p392
      $region82: #{vit_model_forward.4} parent=71 // pred_check_branch
        %1888 = sbr.rel (%p1886) target = $region84
      $region83: #{vit_model_forward.4} parent=71 // pred_region
        _
      $region84: #{vit_model_forward.4} parent=71 // pred_fallthru
        _
    $region72: #{vit_model_forward.4} parent=5 // pred_fallthru
      _
    %p1889 = scmp.le.s32.totalorder 2, %s19
    // Predicated region
    $region85: #{vit_model_forward.4} parent=5 // pred_check
      %p1890 = pneg %p1889
    $region86: #{vit_model_forward.4} parent=5 // pred_check_branch
      %1892 = sbr.rel (%p1890) target = $region88
    $region87: #{vit_model_forward.4} parent=5 // pred_region
      %s1893 = ssub.s32 %s19, 2
      // Predicated region
      $region89: #{vit_model_forward.4} parent=87 // pred_check
        %p1894 = pneg %p398
      $region90: #{vit_model_forward.4} parent=87 // pred_check_branch
        %1896 = sbr.rel (%p1894) target = $region92
      $region91: #{vit_model_forward.4} parent=87 // pred_region
        %p1897 = scmp.lt.s32.totalorder %s30, 1
        %s1898 = scalar_select %p1897, %s30, 1
        %s1899 = smul.addr %s1898, 3
        %s1900 = smul.addr %s1899, 8
        %s1901 = scalar_lea.vmem %s13, %s1900
      $region92: #{vit_model_forward.4} parent=87 // pred_fallthru
        _
    $region88: #{vit_model_forward.4} parent=5 // pred_fallthru
      _
  $region6: #{vit_model_forward.4} parent=0 // loop_footer
    %s23 = sadd.s32 1, %s19
  $region7: #{vit_model_forward.4} parent=0 // loop_footer_branch
    %18 = sbr.rel target = $region3
  $region8: #{vit_model_forward.4} parent=0 // loop_exit
    _

</llo_original>
